<compile_context>
chip_gen: v7x
topology: tpu7x:2x2x1
jax: 0.10.0
libtpu: 0.0.40
codegen_flags: <defaults>
</compile_context>

<pallas_src>
import functools

import jax
import jax.numpy as jnp
from jax.experimental import pallas as pl
from jax.experimental.pallas import tpu as pltpu


def _dilation_bank_kernel(x_ref, w_ref, gb_ref, o_ref, *, shifts, eps):
    n_batch, _, L = x_ref.shape          # (N, Cin, L)  (bf16 or f32)
    _, oc, _ = w_ref.shape               # (U, D*Cout, Cin) per-shift weight slices

    x = x_ref[...]

    # Per-shift accumulation: y_n += W_s @ roll(x_n, -s) for each unique circular shift.
    # No shifted-copy stack is ever concatenated (no sublane relayout), and each dot lands
    # directly in (oc, L) for batch element n, so there is no (o, n, l)->(n, o, l) transpose.
    accs = [jnp.zeros((oc, L), jnp.float32) for _ in range(n_batch)]
    for u, s in enumerate(shifts):
        xs = jnp.roll(x, -s, axis=-1) if s != 0 else x   # static circular lane rotate (XLU)
        wu = w_ref[u]                                    # (oc, cin)
        for n in range(n_batch):                         # N is tiny -> static unroll
            accs[n] = accs[n] + jnp.dot(wu, xs[n], preferred_element_type=jnp.float32)

    # Training-mode BatchNorm1d over (N, L) per channel (biased variance, centered two-pass
    # form to avoid E[y^2]-E[y]^2 cancellation), folded into one scale/shift, fused ReLU.
    # Conv bias is omitted upstream: it cancels exactly under the mean subtraction here.
    cnt = float(n_batch * L)
    tot = accs[0].sum(axis=-1, keepdims=True)
    for n in range(1, n_batch):
        tot = tot + accs[n].sum(axis=-1, keepdims=True)
    mean = tot / cnt                                     # (oc, 1)
    sq = jnp.zeros_like(mean)
    for n in range(n_batch):
        c = accs[n] - mean
        sq = sq + (c * c).sum(axis=-1, keepdims=True)
    var = sq / cnt
    scale = gb_ref[0] * jax.lax.rsqrt(var + eps)         # gamma / sqrt(var + eps), (oc, 1)
    shift = gb_ref[1] - mean * scale                     # beta  - mean * scale,     (oc, 1)
    for n in range(n_batch):
        o_ref[n] = jnp.maximum(accs[n] * scale + shift, 0.0).astype(o_ref.dtype)


def _unique_shifts_and_weights(w, dilations):
    """(D, Cout, Cin, K) conv weights -> (unique shifts, (U, D*Cout, Cin) per-shift bank).

    Circular 'same' conv:  y[d][i] = sum_k w[d,:,:,k] @ x[:, (i + k*dil_d - left_d) mod L],
    left_d = (dil_d*(K-1))//2 (PyTorch split).  Taps that share a shift across dilations
    (e.g. every centre tap) share one column block -> U=7 instead of D*K=9 for (1,2,4),K=3.
    """
    D, Cout, Cin, K = w.shape
    tap_shift = {}
    for d, dil in enumerate(dilations):
        left = (dil * (K - 1)) // 2
        for k in range(K):
            tap_shift[(d, k)] = k * dil - left
    shifts = tuple(sorted(set(tap_shift.values())))
    sidx = {s: u for u, s in enumerate(shifts)}
    wbank = jnp.zeros((len(shifts), D * Cout, Cin), w.dtype)
    for d in range(D):
        for k in range(K):
            u = sidx[tap_shift[(d, k)]]
            wbank = wbank.at[u, d * Cout:(d + 1) * Cout, :].add(w[d, :, :, k])
    return shifts, wbank


def _vmem_admission_budget_bytes():
    """Generation-aware cap for the whole-array (grid-free) path."""
    budget = 12 << 20                       # conservative fallback (< v5e's 16 MiB default)
    try:
        cap = pltpu.get_tpu_info().vmem_capacity_bytes   # 128 MiB v5e/v6e, 64 MiB v7x
        budget = int(min(cap // 4, 24 << 20))
    except Exception:
        pass
    return budget


def dilation_bank(x, w, b, gamma, beta, *, dilations, eps=1e-5, use_bf16_matmul=True):
    """x: (N, Cin, L); w: (D, Cout, Cin, K); b/gamma/beta: (D, Cout, 1).
    Returns (N, D*Cout, L), matching torch.cat(dim=1) over the dilation bank
    (training-mode BatchNorm; running statistics are not updated)."""
    N, Cin, L = x.shape
    D, Cout, _, K = w.shape
    assert D == len(dilations)
    del b  # conv bias cancels exactly under training-mode BatchNorm mean subtraction
    # TODO(synk): restore conv bias and use running statistics if eval-mode BN is needed.

    out_dtype = x.dtype
    OC = D * Cout

    shifts, wbank = _unique_shifts_and_weights(w, tuple(dilations))
    U = len(shifts)

    mm_dtype = jnp.bfloat16 if use_bf16_matmul else x.dtype
    x_mm = x.astype(mm_dtype)
    w_mm = wbank.astype(mm_dtype)
    gb = jnp.stack([gamma.reshape(OC, 1), beta.reshape(OC, 1)], axis=0).astype(jnp.float32)

    # Peak-VMEM accounting (x + one live rolled copy, weights, f32 accumulators, output
    # double-buffer, headroom for compiler temporaries).
    mm_item = jnp.dtype(mm_dtype).itemsize
    x_bytes = N * Cin * L * mm_item
    w_bytes = U * OC * Cin * mm_item
    acc_bytes = N * OC * L * 4
    out_bytes = N * OC * L * jnp.dtype(out_dtype).itemsize
    peak_bytes = 2 * x_bytes + w_bytes + acc_bytes + 2 * out_bytes + (64 << 10)

    budget = _vmem_admission_budget_bytes()
    if peak_bytes > budget:
        # TODO(synk): L-tiled path for large N*L: grid over L tiles (multiples of 128) with
        # a max(dil)*(K-1)//2 circular halo, reduction-style grid for the global BN stats
        # (accumulate sum/sumsq in VMEM scratch, finalize with pl.when, second pass for the
        # scale/shift), dimension_semantics=("parallel", ...) so v7x's 2 TensorCores split it.
        raise ValueError(
            f"Working set {peak_bytes} B exceeds VMEM budget {budget} B; "
            "the L-tiled DilationBank path is required (see TODO).")

    kernel = functools.partial(_dilation_bank_kernel, shifts=shifts, eps=float(eps))

    cost = pl.CostEstimate(
        flops=2 * N * L * OC * U * Cin + 12 * N * OC * L,
        transcendentals=OC,
        bytes_accessed=x_bytes + w_bytes + gb.size * 4 + out_bytes,
    )

    # Grid-free call: one invocation, every operand whole-array resident in VMEM (one DMA
    # each), output written once.  Explicit vmem_limit_bytes sized from the real peak so
    # admitted-but-large inputs don't trip v5e's 16 MiB default scoped limit.
    return pl.pallas_call(
        kernel,
        out_shape=jax.ShapeDtypeStruct((N, OC, L), out_dtype),
        compiler_params=pltpu.CompilerParams(
            vmem_limit_bytes=int(min(max(2 * peak_bytes, 16 << 20), 32 << 20))),
        cost_estimate=cost,
    )(x_mm, w_mm, gb)


def reference(x, w, b, gamma, beta, dilations, eps=1e-5):
    """Plain-JAX reference reproducing the PyTorch forward (circular 'same' conv + bias,
    training-mode BatchNorm1d, ReLU, channel concat)."""
    N, Cin, L = x.shape
    D, Cout, _, K = w.shape
    outs = []
    for di, dil in enumerate(dilations):
        total = dil * (K - 1)
        left = total // 2
        right = total - left
        xp = jnp.concatenate([x[..., L - left:], x, x[..., :right]], axis=-1)
        y = jax.lax.conv_general_dilated(
            xp, w[di], window_strides=(1,), padding='VALID',
            rhs_dilation=(dil,), dimension_numbers=('NCH', 'OIH', 'NCH'))
        y = y + b[di][None]
        mean = jnp.mean(y, axis=(0, 2), keepdims=True)
        var = jnp.mean((y - mean) ** 2, axis=(0, 2), keepdims=True)
        yn = (y - mean) / jnp.sqrt(var + eps)
        outs.append(jnp.maximum(gamma[di][None] * yn + beta[di][None], 0.0))
    return jnp.concatenate(outs, axis=1)


if __name__ == "__main__":
    # Shapes consistent with DilationBank(in_ch=4, out_ch=8, kernel_sizes=3,
    # dilations=(1, 2, 4)) applied to x of shape (N=2, 4, L=128).
    N, Cin, Cout, L, K = 2, 4, 8, 128, 3
    dilations = (1, 2, 4)
    D = len(dilations)

    key = jax.random.PRNGKey(0)
    k1, k2, k3, k4, k5 = jax.random.split(key, 5)
    x = jax.random.normal(k1, (N, Cin, L), jnp.float32)
    w = 0.1 * jax.random.normal(k2, (D, Cout, Cin, K), jnp.float32)       # Conv1d weights
    b = 0.1 * jax.random.normal(k3, (D, Cout, 1), jnp.float32)            # Conv1d biases
    gamma = 1.0 + 0.1 * jax.random.normal(k4, (D, Cout, 1), jnp.float32)  # BN weight
    beta = 0.1 * jax.random.normal(k5, (D, Cout, 1), jnp.float32)         # BN bias

    ref = reference(x, w, b, gamma, beta, dilations)

    # Exact-parity path (f32 MXU operands): tight tolerance against the f32 reference.
    out_f32 = jax.block_until_ready(
        dilation_bank(x, w, b, gamma, beta, dilations=dilations, use_bf16_matmul=False))
    assert out_f32.shape == (N, D * Cout, L), out_f32.shape
    err32 = float(jnp.max(jnp.abs(out_f32 - ref)))
    if not jnp.allclose(out_f32, ref, atol=1e-4, rtol=1e-4):
        raise AssertionError(f"f32 kernel/reference mismatch, max abs err = {err32:e}")

    # Default fast path (bf16 MXU operands, f32 accumulation / BN / ReLU): tolerance only
    # loosened by bf16 rounding of x and the conv weights.
    out_bf16 = jax.block_until_ready(
        dilation_bank(x, w, b, gamma, beta, dilations=dilations))
    assert out_bf16.shape == (N, D * Cout, L), out_bf16.shape
    err16 = float(jnp.max(jnp.abs(out_bf16 - ref)))
    if not jnp.allclose(out_bf16, ref, atol=5e-2, rtol=5e-2):
        raise AssertionError(f"bf16 kernel/reference mismatch, max abs err = {err16:e}")

    print("KERNEL_OK")
</pallas_src>

<mosaic_0001>
module attributes {stable_mosaic.version = 11 : i64} {
  func.func @_dilation_bank_kernel(%arg0: memref<2x4x128xf32, #tpu.memory_space<vmem>>, %arg1: memref<7x24x4xf32, #tpu.memory_space<vmem>>, %arg2: memref<2x24x1xf32, #tpu.memory_space<vmem>>, %arg3: memref<2x24x128xf32, #tpu.memory_space<vmem>>) attributes {dimension_semantics = [], scalar_prefetch = 0 : i64, scratch_operands = 0 : i64, tpu.core_type = #tpu.core_type<tc>} {
    %c0 = arith.constant 0 : index
    %c0_0 = arith.constant 0 : index
    %c0_1 = arith.constant 0 : index
    %0 = vector.load %arg0[%c0, %c0_0, %c0_1] : memref<2x4x128xf32, #tpu.memory_space<vmem>>, vector<2x4x128xf32>
    %cst = arith.constant 0.000000e+00 : f32
    %1 = vector.broadcast %cst : f32 to vector<24x128xf32>
    %cst_2 = arith.constant 0.000000e+00 : f32
    %2 = vector.broadcast %cst_2 : f32 to vector<24x128xf32>
    %3 = vector.extract_strided_slice %0 {offsets = [0, 0, 124], sizes = [2, 4, 4], strides = [1, 1, 1]} : vector<2x4x128xf32> to vector<2x4x4xf32>
    %4 = vector.extract_strided_slice %0 {offsets = [0, 0, 0], sizes = [2, 4, 124], strides = [1, 1, 1]} : vector<2x4x128xf32> to vector<2x4x124xf32>
    %5 = tpu.concatenate %3, %4 in 2 : vector<2x4x4xf32>, vector<2x4x124xf32> -> vector<2x4x128xf32>
    %c0_3 = arith.constant 0 : index
    %c0_4 = arith.constant 0 : index
    %c0_5 = arith.constant 0 : index
    %6 = vector.load %arg1[%c0_3, %c0_4, %c0_5] : memref<7x24x4xf32, #tpu.memory_space<vmem>>, vector<1x24x4xf32>
    %7 = vector.shape_cast %6 : vector<1x24x4xf32> to vector<24x4xf32>
    %8 = vector.extract_strided_slice %5 {offsets = [0, 0, 0], sizes = [1, 4, 128], strides = [1, 1, 1]} : vector<2x4x128xf32> to vector<1x4x128xf32>
    %9 = vector.shape_cast %8 : vector<1x4x128xf32> to vector<4x128xf32>
    %cst_6 = arith.constant dense<0.000000e+00> : vector<24x128xf32>
    %10 = tpu.matmul %7, %9, %cst_6 {dimension_numbers = #tpu.dot_dimension_numbers<[1], [0], [0], [1], [0, 0, 1, 1], [], []>} : vector<24x4xf32>, vector<4x128xf32>, vector<24x128xf32> -> vector<24x128xf32>
    %11 = arith.addf %1, %10 : vector<24x128xf32>
    %12 = vector.extract_strided_slice %5 {offsets = [1, 0, 0], sizes = [1, 4, 128], strides = [1, 1, 1]} : vector<2x4x128xf32> to vector<1x4x128xf32>
    %13 = vector.shape_cast %12 : vector<1x4x128xf32> to vector<4x128xf32>
    %cst_7 = arith.constant dense<0.000000e+00> : vector<24x128xf32>
    %14 = tpu.matmul %7, %13, %cst_7 {dimension_numbers = #tpu.dot_dimension_numbers<[1], [0], [0], [1], [0, 0, 1, 1], [], []>} : vector<24x4xf32>, vector<4x128xf32>, vector<24x128xf32> -> vector<24x128xf32>
    %15 = arith.addf %2, %14 : vector<24x128xf32>
    %16 = vector.extract_strided_slice %0 {offsets = [0, 0, 126], sizes = [2, 4, 2], strides = [1, 1, 1]} : vector<2x4x128xf32> to vector<2x4x2xf32>
    %17 = vector.extract_strided_slice %0 {offsets = [0, 0, 0], sizes = [2, 4, 126], strides = [1, 1, 1]} : vector<2x4x128xf32> to vector<2x4x126xf32>
    %18 = tpu.concatenate %16, %17 in 2 : vector<2x4x2xf32>, vector<2x4x126xf32> -> vector<2x4x128xf32>
    %c1 = arith.constant 1 : index
    %c0_8 = arith.constant 0 : index
    %c0_9 = arith.constant 0 : index
    %19 = vector.load %arg1[%c1, %c0_8, %c0_9] : memref<7x24x4xf32, #tpu.memory_space<vmem>>, vector<1x24x4xf32>
    %20 = vector.shape_cast %19 : vector<1x24x4xf32> to vector<24x4xf32>
    %21 = vector.extract_strided_slice %18 {offsets = [0, 0, 0], sizes = [1, 4, 128], strides = [1, 1, 1]} : vector<2x4x128xf32> to vector<1x4x128xf32>
    %22 = vector.shape_cast %21 : vector<1x4x128xf32> to vector<4x128xf32>
    %cst_10 = arith.constant dense<0.000000e+00> : vector<24x128xf32>
    %23 = tpu.matmul %20, %22, %cst_10 {dimension_numbers = #tpu.dot_dimension_numbers<[1], [0], [0], [1], [0, 0, 1, 1], [], []>} : vector<24x4xf32>, vector<4x128xf32>, vector<24x128xf32> -> vector<24x128xf32>
    %24 = arith.addf %11, %23 : vector<24x128xf32>
    %25 = vector.extract_strided_slice %18 {offsets = [1, 0, 0], sizes = [1, 4, 128], strides = [1, 1, 1]} : vector<2x4x128xf32> to vector<1x4x128xf32>
    %26 = vector.shape_cast %25 : vector<1x4x128xf32> to vector<4x128xf32>
    %cst_11 = arith.constant dense<0.000000e+00> : vector<24x128xf32>
    %27 = tpu.matmul %20, %26, %cst_11 {dimension_numbers = #tpu.dot_dimension_numbers<[1], [0], [0], [1], [0, 0, 1, 1], [], []>} : vector<24x4xf32>, vector<4x128xf32>, vector<24x128xf32> -> vector<24x128xf32>
    %28 = arith.addf %15, %27 : vector<24x128xf32>
    %29 = vector.extract_strided_slice %0 {offsets = [0, 0, 127], sizes = [2, 4, 1], strides = [1, 1, 1]} : vector<2x4x128xf32> to vector<2x4x1xf32>
    %30 = vector.extract_strided_slice %0 {offsets = [0, 0, 0], sizes = [2, 4, 127], strides = [1, 1, 1]} : vector<2x4x128xf32> to vector<2x4x127xf32>
    %31 = tpu.concatenate %29, %30 in 2 : vector<2x4x1xf32>, vector<2x4x127xf32> -> vector<2x4x128xf32>
    %c2 = arith.constant 2 : index
    %c0_12 = arith.constant 0 : index
    %c0_13 = arith.constant 0 : index
    %32 = vector.load %arg1[%c2, %c0_12, %c0_13] : memref<7x24x4xf32, #tpu.memory_space<vmem>>, vector<1x24x4xf32>
    %33 = vector.shape_cast %32 : vector<1x24x4xf32> to vector<24x4xf32>
    %34 = vector.extract_strided_slice %31 {offsets = [0, 0, 0], sizes = [1, 4, 128], strides = [1, 1, 1]} : vector<2x4x128xf32> to vector<1x4x128xf32>
    %35 = vector.shape_cast %34 : vector<1x4x128xf32> to vector<4x128xf32>
    %cst_14 = arith.constant dense<0.000000e+00> : vector<24x128xf32>
    %36 = tpu.matmul %33, %35, %cst_14 {dimension_numbers = #tpu.dot_dimension_numbers<[1], [0], [0], [1], [0, 0, 1, 1], [], []>} : vector<24x4xf32>, vector<4x128xf32>, vector<24x128xf32> -> vector<24x128xf32>
    %37 = arith.addf %24, %36 : vector<24x128xf32>
    %38 = vector.extract_strided_slice %31 {offsets = [1, 0, 0], sizes = [1, 4, 128], strides = [1, 1, 1]} : vector<2x4x128xf32> to vector<1x4x128xf32>
    %39 = vector.shape_cast %38 : vector<1x4x128xf32> to vector<4x128xf32>
    %cst_15 = arith.constant dense<0.000000e+00> : vector<24x128xf32>
    %40 = tpu.matmul %33, %39, %cst_15 {dimension_numbers = #tpu.dot_dimension_numbers<[1], [0], [0], [1], [0, 0, 1, 1], [], []>} : vector<24x4xf32>, vector<4x128xf32>, vector<24x128xf32> -> vector<24x128xf32>
    %41 = arith.addf %28, %40 : vector<24x128xf32>
    %c3 = arith.constant 3 : index
    %c0_16 = arith.constant 0 : index
    %c0_17 = arith.constant 0 : index
    %42 = vector.load %arg1[%c3, %c0_16, %c0_17] : memref<7x24x4xf32, #tpu.memory_space<vmem>>, vector<1x24x4xf32>
    %43 = vector.shape_cast %42 : vector<1x24x4xf32> to vector<24x4xf32>
    %44 = vector.extract_strided_slice %0 {offsets = [0, 0, 0], sizes = [1, 4, 128], strides = [1, 1, 1]} : vector<2x4x128xf32> to vector<1x4x128xf32>
    %45 = vector.shape_cast %44 : vector<1x4x128xf32> to vector<4x128xf32>
    %cst_18 = arith.constant dense<0.000000e+00> : vector<24x128xf32>
    %46 = tpu.matmul %43, %45, %cst_18 {dimension_numbers = #tpu.dot_dimension_numbers<[1], [0], [0], [1], [0, 0, 1, 1], [], []>} : vector<24x4xf32>, vector<4x128xf32>, vector<24x128xf32> -> vector<24x128xf32>
    %47 = arith.addf %37, %46 : vector<24x128xf32>
    %48 = vector.extract_strided_slice %0 {offsets = [1, 0, 0], sizes = [1, 4, 128], strides = [1, 1, 1]} : vector<2x4x128xf32> to vector<1x4x128xf32>
    %49 = vector.shape_cast %48 : vector<1x4x128xf32> to vector<4x128xf32>
    %cst_19 = arith.constant dense<0.000000e+00> : vector<24x128xf32>
    %50 = tpu.matmul %43, %49, %cst_19 {dimension_numbers = #tpu.dot_dimension_numbers<[1], [0], [0], [1], [0, 0, 1, 1], [], []>} : vector<24x4xf32>, vector<4x128xf32>, vector<24x128xf32> -> vector<24x128xf32>
    %51 = arith.addf %41, %50 : vector<24x128xf32>
    %52 = vector.extract_strided_slice %0 {offsets = [0, 0, 1], sizes = [2, 4, 127], strides = [1, 1, 1]} : vector<2x4x128xf32> to vector<2x4x127xf32>
    %53 = vector.extract_strided_slice %0 {offsets = [0, 0, 0], sizes = [2, 4, 1], strides = [1, 1, 1]} : vector<2x4x128xf32> to vector<2x4x1xf32>
    %54 = tpu.concatenate %52, %53 in 2 : vector<2x4x127xf32>, vector<2x4x1xf32> -> vector<2x4x128xf32>
    %c4 = arith.constant 4 : index
    %c0_20 = arith.constant 0 : index
    %c0_21 = arith.constant 0 : index
    %55 = vector.load %arg1[%c4, %c0_20, %c0_21] : memref<7x24x4xf32, #tpu.memory_space<vmem>>, vector<1x24x4xf32>
    %56 = vector.shape_cast %55 : vector<1x24x4xf32> to vector<24x4xf32>
    %57 = vector.extract_strided_slice %54 {offsets = [0, 0, 0], sizes = [1, 4, 128], strides = [1, 1, 1]} : vector<2x4x128xf32> to vector<1x4x128xf32>
    %58 = vector.shape_cast %57 : vector<1x4x128xf32> to vector<4x128xf32>
    %cst_22 = arith.constant dense<0.000000e+00> : vector<24x128xf32>
    %59 = tpu.matmul %56, %58, %cst_22 {dimension_numbers = #tpu.dot_dimension_numbers<[1], [0], [0], [1], [0, 0, 1, 1], [], []>} : vector<24x4xf32>, vector<4x128xf32>, vector<24x128xf32> -> vector<24x128xf32>
    %60 = arith.addf %47, %59 : vector<24x128xf32>
    %61 = vector.extract_strided_slice %54 {offsets = [1, 0, 0], sizes = [1, 4, 128], strides = [1, 1, 1]} : vector<2x4x128xf32> to vector<1x4x128xf32>
    %62 = vector.shape_cast %61 : vector<1x4x128xf32> to vector<4x128xf32>
    %cst_23 = arith.constant dense<0.000000e+00> : vector<24x128xf32>
    %63 = tpu.matmul %56, %62, %cst_23 {dimension_numbers = #tpu.dot_dimension_numbers<[1], [0], [0], [1], [0, 0, 1, 1], [], []>} : vector<24x4xf32>, vector<4x128xf32>, vector<24x128xf32> -> vector<24x128xf32>
    %64 = arith.addf %51, %63 : vector<24x128xf32>
    %65 = vector.extract_strided_slice %0 {offsets = [0, 0, 2], sizes = [2, 4, 126], strides = [1, 1, 1]} : vector<2x4x128xf32> to vector<2x4x126xf32>
    %66 = vector.extract_strided_slice %0 {offsets = [0, 0, 0], sizes = [2, 4, 2], strides = [1, 1, 1]} : vector<2x4x128xf32> to vector<2x4x2xf32>
    %67 = tpu.concatenate %65, %66 in 2 : vector<2x4x126xf32>, vector<2x4x2xf32> -> vector<2x4x128xf32>
    %c5 = arith.constant 5 : index
    %c0_24 = arith.constant 0 : index
    %c0_25 = arith.constant 0 : index
    %68 = vector.load %arg1[%c5, %c0_24, %c0_25] : memref<7x24x4xf32, #tpu.memory_space<vmem>>, vector<1x24x4xf32>
    %69 = vector.shape_cast %68 : vector<1x24x4xf32> to vector<24x4xf32>
    %70 = vector.extract_strided_slice %67 {offsets = [0, 0, 0], sizes = [1, 4, 128], strides = [1, 1, 1]} : vector<2x4x128xf32> to vector<1x4x128xf32>
    %71 = vector.shape_cast %70 : vector<1x4x128xf32> to vector<4x128xf32>
    %cst_26 = arith.constant dense<0.000000e+00> : vector<24x128xf32>
    %72 = tpu.matmul %69, %71, %cst_26 {dimension_numbers = #tpu.dot_dimension_numbers<[1], [0], [0], [1], [0, 0, 1, 1], [], []>} : vector<24x4xf32>, vector<4x128xf32>, vector<24x128xf32> -> vector<24x128xf32>
    %73 = arith.addf %60, %72 : vector<24x128xf32>
    %74 = vector.extract_strided_slice %67 {offsets = [1, 0, 0], sizes = [1, 4, 128], strides = [1, 1, 1]} : vector<2x4x128xf32> to vector<1x4x128xf32>
    %75 = vector.shape_cast %74 : vector<1x4x128xf32> to vector<4x128xf32>
    %cst_27 = arith.constant dense<0.000000e+00> : vector<24x128xf32>
    %76 = tpu.matmul %69, %75, %cst_27 {dimension_numbers = #tpu.dot_dimension_numbers<[1], [0], [0], [1], [0, 0, 1, 1], [], []>} : vector<24x4xf32>, vector<4x128xf32>, vector<24x128xf32> -> vector<24x128xf32>
    %77 = arith.addf %64, %76 : vector<24x128xf32>
    %78 = vector.extract_strided_slice %0 {offsets = [0, 0, 4], sizes = [2, 4, 124], strides = [1, 1, 1]} : vector<2x4x128xf32> to vector<2x4x124xf32>
    %79 = vector.extract_strided_slice %0 {offsets = [0, 0, 0], sizes = [2, 4, 4], strides = [1, 1, 1]} : vector<2x4x128xf32> to vector<2x4x4xf32>
    %80 = tpu.concatenate %78, %79 in 2 : vector<2x4x124xf32>, vector<2x4x4xf32> -> vector<2x4x128xf32>
    %c6 = arith.constant 6 : index
    %c0_28 = arith.constant 0 : index
    %c0_29 = arith.constant 0 : index
    %81 = vector.load %arg1[%c6, %c0_28, %c0_29] : memref<7x24x4xf32, #tpu.memory_space<vmem>>, vector<1x24x4xf32>
    %82 = vector.shape_cast %81 : vector<1x24x4xf32> to vector<24x4xf32>
    %83 = vector.extract_strided_slice %80 {offsets = [0, 0, 0], sizes = [1, 4, 128], strides = [1, 1, 1]} : vector<2x4x128xf32> to vector<1x4x128xf32>
    %84 = vector.shape_cast %83 : vector<1x4x128xf32> to vector<4x128xf32>
    %cst_30 = arith.constant dense<0.000000e+00> : vector<24x128xf32>
    %85 = tpu.matmul %82, %84, %cst_30 {dimension_numbers = #tpu.dot_dimension_numbers<[1], [0], [0], [1], [0, 0, 1, 1], [], []>} : vector<24x4xf32>, vector<4x128xf32>, vector<24x128xf32> -> vector<24x128xf32>
    %86 = arith.addf %73, %85 : vector<24x128xf32>
    %87 = vector.extract_strided_slice %80 {offsets = [1, 0, 0], sizes = [1, 4, 128], strides = [1, 1, 1]} : vector<2x4x128xf32> to vector<1x4x128xf32>
    %88 = vector.shape_cast %87 : vector<1x4x128xf32> to vector<4x128xf32>
    %cst_31 = arith.constant dense<0.000000e+00> : vector<24x128xf32>
    %89 = tpu.matmul %82, %88, %cst_31 {dimension_numbers = #tpu.dot_dimension_numbers<[1], [0], [0], [1], [0, 0, 1, 1], [], []>} : vector<24x4xf32>, vector<4x128xf32>, vector<24x128xf32> -> vector<24x128xf32>
    %90 = arith.addf %77, %89 : vector<24x128xf32>
    %cst_32 = arith.constant dense<0.000000e+00> : vector<24xf32>
    %91 = vector.multi_reduction <add>, %86, %cst_32 [1] : vector<24x128xf32> to vector<24xf32>
    %92 = vector.shape_cast %91 : vector<24xf32> to vector<24x1xf32>
    %cst_33 = arith.constant dense<0.000000e+00> : vector<24xf32>
    %93 = vector.multi_reduction <add>, %90, %cst_33 [1] : vector<24x128xf32> to vector<24xf32>
    %94 = vector.shape_cast %93 : vector<24xf32> to vector<24x1xf32>
    %95 = arith.addf %92, %94 : vector<24x1xf32>
    %cst_34 = arith.constant 2.560000e+02 : f32
    %96 = vector.broadcast %cst_34 : f32 to vector<24x1xf32>
    %97 = arith.divf %95, %96 : vector<24x1xf32>
    %cst_35 = arith.constant 0.000000e+00 : f32
    %98 = vector.broadcast %cst_35 : f32 to vector<24x1xf32>
    %99 = vector.broadcast %97 : vector<24x1xf32> to vector<24x128xf32>
    %100 = arith.subf %86, %99 : vector<24x128xf32>
    %101 = arith.mulf %100, %100 : vector<24x128xf32>
    %cst_36 = arith.constant dense<0.000000e+00> : vector<24xf32>
    %102 = vector.multi_reduction <add>, %101, %cst_36 [1] : vector<24x128xf32> to vector<24xf32>
    %103 = vector.shape_cast %102 : vector<24xf32> to vector<24x1xf32>
    %104 = arith.addf %98, %103 : vector<24x1xf32>
    %105 = vector.broadcast %97 : vector<24x1xf32> to vector<24x128xf32>
    %106 = arith.subf %90, %105 : vector<24x128xf32>
    %107 = arith.mulf %106, %106 : vector<24x128xf32>
    %cst_37 = arith.constant dense<0.000000e+00> : vector<24xf32>
    %108 = vector.multi_reduction <add>, %107, %cst_37 [1] : vector<24x128xf32> to vector<24xf32>
    %109 = vector.shape_cast %108 : vector<24xf32> to vector<24x1xf32>
    %110 = arith.addf %104, %109 : vector<24x1xf32>
    %cst_38 = arith.constant 2.560000e+02 : f32
    %111 = vector.broadcast %cst_38 : f32 to vector<24x1xf32>
    %112 = arith.divf %110, %111 : vector<24x1xf32>
    %c0_39 = arith.constant 0 : index
    %c0_40 = arith.constant 0 : index
    %c0_41 = arith.constant 0 : index
    %113 = vector.load %arg2[%c0_39, %c0_40, %c0_41] : memref<2x24x1xf32, #tpu.memory_space<vmem>>, vector<1x24x1xf32>
    %114 = vector.shape_cast %113 : vector<1x24x1xf32> to vector<24x1xf32>
    %cst_42 = arith.constant 9.99999974E-6 : f32
    %115 = vector.broadcast %cst_42 : f32 to vector<24x1xf32>
    %116 = arith.addf %112, %115 : vector<24x1xf32>
    %117 = math.rsqrt %116 : vector<24x1xf32>
    %118 = arith.mulf %114, %117 : vector<24x1xf32>
    %c1_43 = arith.constant 1 : index
    %c0_44 = arith.constant 0 : index
    %c0_45 = arith.constant 0 : index
    %119 = vector.load %arg2[%c1_43, %c0_44, %c0_45] : memref<2x24x1xf32, #tpu.memory_space<vmem>>, vector<1x24x1xf32>
    %120 = vector.shape_cast %119 : vector<1x24x1xf32> to vector<24x1xf32>
    %121 = arith.mulf %97, %118 : vector<24x1xf32>
    %122 = arith.subf %120, %121 : vector<24x1xf32>
    %123 = vector.broadcast %118 : vector<24x1xf32> to vector<24x128xf32>
    %124 = arith.mulf %86, %123 : vector<24x128xf32>
    %125 = vector.broadcast %122 : vector<24x1xf32> to vector<24x128xf32>
    %126 = arith.addf %124, %125 : vector<24x128xf32>
    %cst_46 = arith.constant 0.000000e+00 : f32
    %127 = vector.broadcast %cst_46 : f32 to vector<24x128xf32>
    %128 = arith.maximumf %126, %127 : vector<24x128xf32>
    %c0_47 = arith.constant 0 : index
    %c0_48 = arith.constant 0 : index
    %c0_49 = arith.constant 0 : index
    %129 = vector.load %arg3[%c0_47, %c0_48, %c0_49] : memref<2x24x128xf32, #tpu.memory_space<vmem>>, vector<1x24x128xf32>
    %130 = vector.shape_cast %129 : vector<1x24x128xf32> to vector<24x128xf32>
    %131 = vector.shape_cast %128 : vector<24x128xf32> to vector<1x24x128xf32>
    tpu.vector_store %arg3[%c0_47, %c0_48, %c0_49], %131 {strides = array<i32>} : memref<2x24x128xf32, #tpu.memory_space<vmem>>, vector<1x24x128xf32>,
    %132 = vector.broadcast %118 : vector<24x1xf32> to vector<24x128xf32>
    %133 = arith.mulf %90, %132 : vector<24x128xf32>
    %134 = vector.broadcast %122 : vector<24x1xf32> to vector<24x128xf32>
    %135 = arith.addf %133, %134 : vector<24x128xf32>
    %cst_50 = arith.constant 0.000000e+00 : f32
    %136 = vector.broadcast %cst_50 : f32 to vector<24x128xf32>
    %137 = arith.maximumf %135, %136 : vector<24x128xf32>
    %c1_51 = arith.constant 1 : index
    %c0_52 = arith.constant 0 : index
    %c0_53 = arith.constant 0 : index
    %138 = vector.load %arg3[%c1_51, %c0_52, %c0_53] : memref<2x24x128xf32, #tpu.memory_space<vmem>>, vector<1x24x128xf32>
    %139 = vector.shape_cast %138 : vector<1x24x128xf32> to vector<24x128xf32>
    %140 = vector.shape_cast %137 : vector<24x128xf32> to vector<1x24x128xf32>
    tpu.vector_store %arg3[%c1_51, %c0_52, %c0_53], %140 {strides = array<i32>} : memref<2x24x128xf32, #tpu.memory_space<vmem>>, vector<1x24x128xf32>,
    return
  }
}

</mosaic_0001>

<llo_original>
// kernel: tpu_custom_call.1
$region0: #{tpu_custom_call.1}
  #allocation0 [shape = 'u32[]', space=smem, size = 0x4, offset = 0x4, fixed_abs, tag = 'smem constant byte address 0x4 - core index']
  #allocation1 [shape = 'u32[144,128]{1,0:T(1,128)}', space=vmem, size = 0x12000, scoped, tag = 'internal scratch']
  %s0 = inlined_call_operand.vmem [shape: f32[2,4,128], index: 0, kind: input, shape index: {}]
  %s1 = inlined_call_operand.vmem [shape: f32[7,24,4], index: 1, kind: input, shape index: {}]
  %s2 = inlined_call_operand.vmem [shape: f32[2,24,1], index: 2, kind: input, shape index: {}]
  %s3 = inlined_call_operand.hbm [shape: f32[2,24,128], index: 3, kind: output, shape index: {}]
  %s4 = sld [smem:[#allocation0]]
  $region22: #{tpu_custom_call.1} parent=0
    _
  %s6 = ssub.s32 1, %s4
  %s7 = scalar_select 0, %s6, %s4
  $region1: #{tpu_custom_call.1} parent=0
    #allocation2 [shape = 'u8[24576]{0}', space=vmem, size = 0x6000, scoped, tag = 'output window, operand 0, single buffered']
    #allocation3 [shape = 's32[1]{0}', space=sflag, size = 0x4, scoped, tag = 'scoped memory for tpu_custom_call.1']
    %8 = vsyncpa [#allocation3], 0
    // Predicated region
    $region2: #{tpu_custom_call.1} parent=1 // pred_check
      _
    $region3: #{tpu_custom_call.1} parent=1 // pred_check_branch
      %10 = sbr.rel (0) target = $region5
    $region4: #{tpu_custom_call.1} parent=1 // pred_region
      _
    $region5: #{tpu_custom_call.1} parent=1 // pred_fallthru
      _
    // Predicated region
    $region6: #{tpu_custom_call.1} parent=1 // pred_check
      _
    $region7: #{tpu_custom_call.1} parent=1 // pred_check_branch
      %12 = sbr.rel (0) target = $region9
    $region8: #{tpu_custom_call.1} parent=1 // pred_region
      _
    $region9: #{tpu_custom_call.1} parent=1 // pred_fallthru
      _
    // Predicated region
    $region10: #{tpu_custom_call.1} parent=1 // pred_check
      _
    $region11: #{tpu_custom_call.1} parent=1 // pred_check_branch
      %14 = sbr.rel (0) target = $region13
    $region12: #{tpu_custom_call.1} parent=1 // pred_region
      _
    $region13: #{tpu_custom_call.1} parent=1 // pred_fallthru
      _
    %v15 = vld [vmem:[%s0] sm:$0xf]
    %v16 = vld [vmem:[%s0 + $0x4] sm:$0xf]
    %19 = vrot.lane.b32.xlu0 %v15, 4
    %v20 = vpop.permute.xlu0 %19
    %21 = vrot.lane.b32.xlu0 %v16, 4
    %v22 = vpop.permute.xlu0 %21
    %vm25 = vcmask 31744
    %v26 = vld [vmem:[%s1] sm:$0xff]
    %v27 = vld [vmem:[%s1 + $0x8] sm:$0xff]
    %v28 = vld [vmem:[%s1 + $0x10] sm:$0xff]
    %29 = vrot.lane.b32.xlu0 %v15, 2
    %v30 = vpop.permute.xlu0 %29
    %31 = vrot.lane.b32.xlu0 %v16, 2
    %v32 = vpop.permute.xlu0 %31
    %s35 = scalar_lea.vmem %s1, 24
    %v36 = vld [vmem:[%s35] sm:$0xff]
    %v37 = vld [vmem:[%s35 + $0x8] sm:$0xff]
    %v38 = vld [vmem:[%s35 + $0x10] sm:$0xff]
    %v40 = vsel %vm25, %v36, 0
    %v43 = vsel %vm25, %v37, 0
    %v46 = vsel %vm25, %v38, 0
    %vm48 = vcmask 1043456
    %v50 = vsel %vm48, %v30, 0
    %52 = vmatprep.subr.mxu0 0.0
    %53 = vmatpush1.msra.mxu0 %v50
    %54 = vmatprep.subr.mxu0 0.0
    %55 = vmatpush1.msra.mxu0 0.0
    %56 = vmatprep.subr.mxu0 0.0
    %57 = vmatpush1.msra.mxu0 0.0
    %58 = vmatprep.subr.mxu0 0.0
    %59 = vmatpush1.msra.mxu0 0.0
    %60 = vmatprep.subr.mxu0 0.0
    %61 = vmatpush1.msra.mxu0 0.0
    %62 = vmatprep.subr.mxu0 0.0
    %63 = vmatpush1.msra.mxu0 0.0
    %64 = vmatprep.subr.mxu0 0.0
    %65 = vmatpush1.msra.mxu0 0.0
    %66 = vmatprep.subr.mxu0 0.0
    %67 = vmatpush1.msra.mxu0 0.0
    %68 = vmatprep.subr.mxu0 0.0
    %69 = vmatpush1.msra.mxu0 0.0
    %70 = vmatprep.subr.mxu0 0.0
    %71 = vmatpush1.msra.mxu0 0.0
    %72 = vmatprep.subr.mxu0 0.0
    %73 = vmatpush1.msra.mxu0 0.0
    %74 = vmatprep.subr.mxu0 0.0
    %75 = vmatpush1.msra.mxu0 0.0
    %76 = vmatprep.subr.mxu0 0.0
    %77 = vmatpush1.msra.mxu0 0.0
    %78 = vmatprep.subr.mxu0 0.0
    %79 = vmatpush1.msra.mxu0 0.0
    %80 = vmatprep.subr.mxu0 0.0
    %81 = vmatpush1.msra.mxu0 0.0
    %82 = vmatprep.subr.mxu0 0.0
    %83 = vmatpush1.msra.mxu0 0.0
    %84 = vmatprep.subr.mxu0 0.0
    %85 = vmatpush1.msra.mxu0 0.0
    %86 = vmatprep.subr.mxu0 0.0
    %87 = vmatpush1.msra.mxu0 0.0
    %88 = vmatprep.subr.mxu0 0.0
    %89 = vmatpush1.msra.mxu0 0.0
    %90 = vmatprep.subr.mxu0 0.0
    %91 = vmatpush1.msra.mxu0 0.0
    %92 = vmatprep.subr.mxu0 0.0
    %93 = vmatpush1.msra.mxu0 0.0
    %94 = vmatprep.subr.mxu0 0.0
    %95 = vmatpush1.msra.mxu0 0.0
    %96 = vmatprep.subr.mxu0 0.0
    %97 = vmatpush1.msra.mxu0 0.0
    %98 = vmatprep.subr.mxu0 0.0
    %99 = vmatpush1.msra.mxu0 0.0
    %100 = vmatprep.subr.mxu0 0.0
    %101 = vmatpush1.msra.mxu0 0.0
    %102 = vmatprep.subr.mxu0 0.0
    %103 = vmatpush1.msra.mxu0 0.0
    %104 = vmatprep.subr.mxu0 0.0
    %105 = vmatpush1.msra.mxu0 0.0
    %106 = vmatprep.subr.mxu0 0.0
    %107 = vmatpush1.msra.mxu0 0.0
    %108 = vmatprep.subr.mxu0 0.0
    %109 = vmatpush1.msra.mxu0 0.0
    %110 = vmatprep.subr.mxu0 0.0
    %111 = vmatpush1.msra.mxu0 0.0
    %112 = vmatprep.subr.mxu0 0.0
    %113 = vmatpush1.msra.mxu0 0.0
    %114 = vmatprep.subr.mxu0 0.0
    %115 = vmatpush1.msra.mxu0 0.0
    %116 = vmatprep.mubr.f32.mxu0 0.0
    %117 = vmatmul.mubr.f32.gmra.mrb[0].mxu0 %v40
    %v118 = vpop.f32.mrb[0].mxu0
    %v119 = vadd.f32 0.0, %v118
    %v120 = vpop.f32.mrb[0].mxu0
    %121 = vmatprep.mubr.f32.mxu0 0.0
    %122 = vmatmul.mubr.f32.gmra.mrb[0].mxu0 %v43
    %v123 = vpop.f32.mrb[0].mxu0
    %v124 = vadd.f32 0.0, %v123
    %v125 = vpop.f32.mrb[0].mxu0
    %126 = vmatprep.mubr.f32.mxu0 0.0
    %127 = vmatmul.mubr.f32.gmra.mrb[0].mxu0 %v46
    %v128 = vpop.f32.mrb[0].mxu0
    %v129 = vadd.f32 0.0, %v128
    %v130 = vpop.f32.mrb[0].mxu0
    %131 = vdwg.mxu0
    %v133 = vsel %vm25, %v26, 0
    %v136 = vsel %vm25, %v27, 0
    %v139 = vsel %vm25, %v28, 0
    %v142 = vsel %vm48, %v20, 0
    %144 = vmatprep.subr.mxu0 0.0
    %145 = vmatpush1.msra.mxu0 %v142
    %146 = vmatprep.subr.mxu0 0.0
    %147 = vmatpush1.msra.mxu0 0.0
    %148 = vmatprep.subr.mxu0 0.0
    %149 = vmatpush1.msra.mxu0 0.0
    %150 = vmatprep.subr.mxu0 0.0
    %151 = vmatpush1.msra.mxu0 0.0
    %152 = vmatprep.subr.mxu0 0.0
    %153 = vmatpush1.msra.mxu0 0.0
    %154 = vmatprep.subr.mxu0 0.0
    %155 = vmatpush1.msra.mxu0 0.0
    %156 = vmatprep.subr.mxu0 0.0
    %157 = vmatpush1.msra.mxu0 0.0
    %158 = vmatprep.subr.mxu0 0.0
    %159 = vmatpush1.msra.mxu0 0.0
    %160 = vmatprep.subr.mxu0 0.0
    %161 = vmatpush1.msra.mxu0 0.0
    %162 = vmatprep.subr.mxu0 0.0
    %163 = vmatpush1.msra.mxu0 0.0
    %164 = vmatprep.subr.mxu0 0.0
    %165 = vmatpush1.msra.mxu0 0.0
    %166 = vmatprep.subr.mxu0 0.0
    %167 = vmatpush1.msra.mxu0 0.0
    %168 = vmatprep.subr.mxu0 0.0
    %169 = vmatpush1.msra.mxu0 0.0
    %170 = vmatprep.subr.mxu0 0.0
    %171 = vmatpush1.msra.mxu0 0.0
    %172 = vmatprep.subr.mxu0 0.0
    %173 = vmatpush1.msra.mxu0 0.0
    %174 = vmatprep.subr.mxu0 0.0
    %175 = vmatpush1.msra.mxu0 0.0
    %176 = vmatprep.subr.mxu0 0.0
    %177 = vmatpush1.msra.mxu0 0.0
    %178 = vmatprep.subr.mxu0 0.0
    %179 = vmatpush1.msra.mxu0 0.0
    %180 = vmatprep.subr.mxu0 0.0
    %181 = vmatpush1.msra.mxu0 0.0
    %182 = vmatprep.subr.mxu0 0.0
    %183 = vmatpush1.msra.mxu0 0.0
    %184 = vmatprep.subr.mxu0 0.0
    %185 = vmatpush1.msra.mxu0 0.0
    %186 = vmatprep.subr.mxu0 0.0
    %187 = vmatpush1.msra.mxu0 0.0
    %188 = vmatprep.subr.mxu0 0.0
    %189 = vmatpush1.msra.mxu0 0.0
    %190 = vmatprep.subr.mxu0 0.0
    %191 = vmatpush1.msra.mxu0 0.0
    %192 = vmatprep.subr.mxu0 0.0
    %193 = vmatpush1.msra.mxu0 0.0
    %194 = vmatprep.subr.mxu0 0.0
    %195 = vmatpush1.msra.mxu0 0.0
    %196 = vmatprep.subr.mxu0 0.0
    %197 = vmatpush1.msra.mxu0 0.0
    %198 = vmatprep.subr.mxu0 0.0
    %199 = vmatpush1.msra.mxu0 0.0
    %200 = vmatprep.subr.mxu0 0.0
    %201 = vmatpush1.msra.mxu0 0.0
    %202 = vmatprep.subr.mxu0 0.0
    %203 = vmatpush1.msra.mxu0 0.0
    %204 = vmatprep.subr.mxu0 0.0
    %205 = vmatpush1.msra.mxu0 0.0
    %206 = vmatprep.subr.mxu0 0.0
    %207 = vmatpush1.msra.mxu0 0.0
    %208 = vmatprep.mubr.f32.mxu0 0.0
    %209 = vmatmul.mubr.f32.gmra.mrb[0].mxu0 %v133
    %v210 = vpop.f32.mrb[0].mxu0
    %v211 = vadd.f32 %v119, %v210
    %v212 = vpop.f32.mrb[0].mxu0
    %213 = vmatprep.mubr.f32.mxu0 0.0
    %214 = vmatmul.mubr.f32.gmra.mrb[0].mxu0 %v136
    %v215 = vpop.f32.mrb[0].mxu0
    %v216 = vadd.f32 %v124, %v215
    %v217 = vpop.f32.mrb[0].mxu0
    %218 = vmatprep.mubr.f32.mxu0 0.0
    %219 = vmatmul.mubr.f32.gmra.mrb[0].mxu0 %v139
    %v220 = vpop.f32.mrb[0].mxu0
    %v221 = vadd.f32 %v129, %v220
    %v222 = vpop.f32.mrb[0].mxu0
    %223 = vdwg.mxu0
    %v225 = vsel %vm48, %v32, 0
    %227 = vmatprep.subr.mxu0 0.0
    %228 = vmatpush1.msra.mxu0 %v225
    %229 = vmatprep.subr.mxu0 0.0
    %230 = vmatpush1.msra.mxu0 0.0
    %231 = vmatprep.subr.mxu0 0.0
    %232 = vmatpush1.msra.mxu0 0.0
    %233 = vmatprep.subr.mxu0 0.0
    %234 = vmatpush1.msra.mxu0 0.0
    %235 = vmatprep.subr.mxu0 0.0
    %236 = vmatpush1.msra.mxu0 0.0
    %237 = vmatprep.subr.mxu0 0.0
    %238 = vmatpush1.msra.mxu0 0.0
    %239 = vmatprep.subr.mxu0 0.0
    %240 = vmatpush1.msra.mxu0 0.0
    %241 = vmatprep.subr.mxu0 0.0
    %242 = vmatpush1.msra.mxu0 0.0
    %243 = vmatprep.subr.mxu0 0.0
    %244 = vmatpush1.msra.mxu0 0.0
    %245 = vmatprep.subr.mxu0 0.0
    %246 = vmatpush1.msra.mxu0 0.0
    %247 = vmatprep.subr.mxu0 0.0
    %248 = vmatpush1.msra.mxu0 0.0
    %249 = vmatprep.subr.mxu0 0.0
    %250 = vmatpush1.msra.mxu0 0.0
    %251 = vmatprep.subr.mxu0 0.0
    %252 = vmatpush1.msra.mxu0 0.0
    %253 = vmatprep.subr.mxu0 0.0
    %254 = vmatpush1.msra.mxu0 0.0
    %255 = vmatprep.subr.mxu0 0.0
    %256 = vmatpush1.msra.mxu0 0.0
    %257 = vmatprep.subr.mxu0 0.0
    %258 = vmatpush1.msra.mxu0 0.0
    %259 = vmatprep.subr.mxu0 0.0
    %260 = vmatpush1.msra.mxu0 0.0
    %261 = vmatprep.subr.mxu0 0.0
    %262 = vmatpush1.msra.mxu0 0.0
    %263 = vmatprep.subr.mxu0 0.0
    %264 = vmatpush1.msra.mxu0 0.0
    %265 = vmatprep.subr.mxu0 0.0
    %266 = vmatpush1.msra.mxu0 0.0
    %267 = vmatprep.subr.mxu0 0.0
    %268 = vmatpush1.msra.mxu0 0.0
    %269 = vmatprep.subr.mxu0 0.0
    %270 = vmatpush1.msra.mxu0 0.0
    %271 = vmatprep.subr.mxu0 0.0
    %272 = vmatpush1.msra.mxu0 0.0
    %273 = vmatprep.subr.mxu0 0.0
    %274 = vmatpush1.msra.mxu0 0.0
    %275 = vmatprep.subr.mxu0 0.0
    %276 = vmatpush1.msra.mxu0 0.0
    %277 = vmatprep.subr.mxu0 0.0
    %278 = vmatpush1.msra.mxu0 0.0
    %279 = vmatprep.subr.mxu0 0.0
    %280 = vmatpush1.msra.mxu0 0.0
    %281 = vmatprep.subr.mxu0 0.0
    %282 = vmatpush1.msra.mxu0 0.0
    %283 = vmatprep.subr.mxu0 0.0
    %284 = vmatpush1.msra.mxu0 0.0
    %285 = vmatprep.subr.mxu0 0.0
    %286 = vmatpush1.msra.mxu0 0.0
    %287 = vmatprep.subr.mxu0 0.0
    %288 = vmatpush1.msra.mxu0 0.0
    %289 = vmatprep.subr.mxu0 0.0
    %290 = vmatpush1.msra.mxu0 0.0
    %291 = vmatprep.mubr.f32.mxu0 0.0
    %292 = vmatmul.mubr.f32.gmra.mrb[0].mxu0 %v40
    %v293 = vpop.f32.mrb[0].mxu0
    %v294 = vadd.f32 0.0, %v293
    %v295 = vpop.f32.mrb[0].mxu0
    %296 = vmatprep.mubr.f32.mxu0 0.0
    %297 = vmatmul.mubr.f32.gmra.mrb[0].mxu0 %v43
    %v298 = vpop.f32.mrb[0].mxu0
    %v299 = vadd.f32 0.0, %v298
    %v300 = vpop.f32.mrb[0].mxu0
    %301 = vmatprep.mubr.f32.mxu0 0.0
    %302 = vmatmul.mubr.f32.gmra.mrb[0].mxu0 %v46
    %v303 = vpop.f32.mrb[0].mxu0
    %v304 = vadd.f32 0.0, %v303
    %v305 = vpop.f32.mrb[0].mxu0
    %306 = vdwg.mxu0
    %v308 = vsel %vm48, %v22, 0
    %310 = vmatprep.subr.mxu0 0.0
    %311 = vmatpush1.msra.mxu0 %v308
    %312 = vmatprep.subr.mxu0 0.0
    %313 = vmatpush1.msra.mxu0 0.0
    %314 = vmatprep.subr.mxu0 0.0
    %315 = vmatpush1.msra.mxu0 0.0
    %316 = vmatprep.subr.mxu0 0.0
    %317 = vmatpush1.msra.mxu0 0.0
    %318 = vmatprep.subr.mxu0 0.0
    %319 = vmatpush1.msra.mxu0 0.0
    %320 = vmatprep.subr.mxu0 0.0
    %321 = vmatpush1.msra.mxu0 0.0
    %322 = vmatprep.subr.mxu0 0.0
    %323 = vmatpush1.msra.mxu0 0.0
    %324 = vmatprep.subr.mxu0 0.0
    %325 = vmatpush1.msra.mxu0 0.0
    %326 = vmatprep.subr.mxu0 0.0
    %327 = vmatpush1.msra.mxu0 0.0
    %328 = vmatprep.subr.mxu0 0.0
    %329 = vmatpush1.msra.mxu0 0.0
    %330 = vmatprep.subr.mxu0 0.0
    %331 = vmatpush1.msra.mxu0 0.0
    %332 = vmatprep.subr.mxu0 0.0
    %333 = vmatpush1.msra.mxu0 0.0
    %334 = vmatprep.subr.mxu0 0.0
    %335 = vmatpush1.msra.mxu0 0.0
    %336 = vmatprep.subr.mxu0 0.0
    %337 = vmatpush1.msra.mxu0 0.0
    %338 = vmatprep.subr.mxu0 0.0
    %339 = vmatpush1.msra.mxu0 0.0
    %340 = vmatprep.subr.mxu0 0.0
    %341 = vmatpush1.msra.mxu0 0.0
    %342 = vmatprep.subr.mxu0 0.0
    %343 = vmatpush1.msra.mxu0 0.0
    %344 = vmatprep.subr.mxu0 0.0
    %345 = vmatpush1.msra.mxu0 0.0
    %346 = vmatprep.subr.mxu0 0.0
    %347 = vmatpush1.msra.mxu0 0.0
    %348 = vmatprep.subr.mxu0 0.0
    %349 = vmatpush1.msra.mxu0 0.0
    %350 = vmatprep.subr.mxu0 0.0
    %351 = vmatpush1.msra.mxu0 0.0
    %352 = vmatprep.subr.mxu0 0.0
    %353 = vmatpush1.msra.mxu0 0.0
    %354 = vmatprep.subr.mxu0 0.0
    %355 = vmatpush1.msra.mxu0 0.0
    %356 = vmatprep.subr.mxu0 0.0
    %357 = vmatpush1.msra.mxu0 0.0
    %358 = vmatprep.subr.mxu0 0.0
    %359 = vmatpush1.msra.mxu0 0.0
    %360 = vmatprep.subr.mxu0 0.0
    %361 = vmatpush1.msra.mxu0 0.0
    %362 = vmatprep.subr.mxu0 0.0
    %363 = vmatpush1.msra.mxu0 0.0
    %364 = vmatprep.subr.mxu0 0.0
    %365 = vmatpush1.msra.mxu0 0.0
    %366 = vmatprep.subr.mxu0 0.0
    %367 = vmatpush1.msra.mxu0 0.0
    %368 = vmatprep.subr.mxu0 0.0
    %369 = vmatpush1.msra.mxu0 0.0
    %370 = vmatprep.subr.mxu0 0.0
    %371 = vmatpush1.msra.mxu0 0.0
    %372 = vmatprep.subr.mxu0 0.0
    %373 = vmatpush1.msra.mxu0 0.0
    %374 = vmatprep.mubr.f32.mxu0 0.0
    %375 = vmatmul.mubr.f32.gmra.mrb[0].mxu0 %v133
    %v376 = vpop.f32.mrb[0].mxu0
    %v377 = vadd.f32 %v294, %v376
    %v378 = vpop.f32.mrb[0].mxu0
    %379 = vmatprep.mubr.f32.mxu0 0.0
    %380 = vmatmul.mubr.f32.gmra.mrb[0].mxu0 %v136
    %v381 = vpop.f32.mrb[0].mxu0
    %v382 = vadd.f32 %v299, %v381
    %v383 = vpop.f32.mrb[0].mxu0
    %384 = vmatprep.mubr.f32.mxu0 0.0
    %385 = vmatmul.mubr.f32.gmra.mrb[0].mxu0 %v139
    %v386 = vpop.f32.mrb[0].mxu0
    %v387 = vadd.f32 %v304, %v386
    %v388 = vpop.f32.mrb[0].mxu0
    %389 = vdwg.mxu0
    %390 = vrot.lane.b32.xlu0 %v15, 1
    %v391 = vpop.permute.xlu0 %390
    %392 = vrot.lane.b32.xlu0 %v16, 1
    %v393 = vpop.permute.xlu0 %392
    %s396 = scalar_lea.vmem %s1, 48
    %v397 = vld [vmem:[%s396] sm:$0xff]
    %v398 = vld [vmem:[%s396 + $0x8] sm:$0xff]
    %v399 = vld [vmem:[%s396 + $0x10] sm:$0xff]
    %v401 = vsel %vm25, %v397, 0
    %v404 = vsel %vm25, %v398, 0
    %v407 = vsel %vm25, %v399, 0
    %v410 = vsel %vm48, %v391, 0
    %412 = vmatprep.subr.mxu0 0.0
    %413 = vmatpush1.msra.mxu0 %v410
    %414 = vmatprep.subr.mxu0 0.0
    %415 = vmatpush1.msra.mxu0 0.0
    %416 = vmatprep.subr.mxu0 0.0
    %417 = vmatpush1.msra.mxu0 0.0
    %418 = vmatprep.subr.mxu0 0.0
    %419 = vmatpush1.msra.mxu0 0.0
    %420 = vmatprep.subr.mxu0 0.0
    %421 = vmatpush1.msra.mxu0 0.0
    %422 = vmatprep.subr.mxu0 0.0
    %423 = vmatpush1.msra.mxu0 0.0
    %424 = vmatprep.subr.mxu0 0.0
    %425 = vmatpush1.msra.mxu0 0.0
    %426 = vmatprep.subr.mxu0 0.0
    %427 = vmatpush1.msra.mxu0 0.0
    %428 = vmatprep.subr.mxu0 0.0
    %429 = vmatpush1.msra.mxu0 0.0
    %430 = vmatprep.subr.mxu0 0.0
    %431 = vmatpush1.msra.mxu0 0.0
    %432 = vmatprep.subr.mxu0 0.0
    %433 = vmatpush1.msra.mxu0 0.0
    %434 = vmatprep.subr.mxu0 0.0
    %435 = vmatpush1.msra.mxu0 0.0
    %436 = vmatprep.subr.mxu0 0.0
    %437 = vmatpush1.msra.mxu0 0.0
    %438 = vmatprep.subr.mxu0 0.0
    %439 = vmatpush1.msra.mxu0 0.0
    %440 = vmatprep.subr.mxu0 0.0
    %441 = vmatpush1.msra.mxu0 0.0
    %442 = vmatprep.subr.mxu0 0.0
    %443 = vmatpush1.msra.mxu0 0.0
    %444 = vmatprep.subr.mxu0 0.0
    %445 = vmatpush1.msra.mxu0 0.0
    %446 = vmatprep.subr.mxu0 0.0
    %447 = vmatpush1.msra.mxu0 0.0
    %448 = vmatprep.subr.mxu0 0.0
    %449 = vmatpush1.msra.mxu0 0.0
    %450 = vmatprep.subr.mxu0 0.0
    %451 = vmatpush1.msra.mxu0 0.0
    %452 = vmatprep.subr.mxu0 0.0
    %453 = vmatpush1.msra.mxu0 0.0
    %454 = vmatprep.subr.mxu0 0.0
    %455 = vmatpush1.msra.mxu0 0.0
    %456 = vmatprep.subr.mxu0 0.0
    %457 = vmatpush1.msra.mxu0 0.0
    %458 = vmatprep.subr.mxu0 0.0
    %459 = vmatpush1.msra.mxu0 0.0
    %460 = vmatprep.subr.mxu0 0.0
    %461 = vmatpush1.msra.mxu0 0.0
    %462 = vmatprep.subr.mxu0 0.0
    %463 = vmatpush1.msra.mxu0 0.0
    %464 = vmatprep.subr.mxu0 0.0
    %465 = vmatpush1.msra.mxu0 0.0
    %466 = vmatprep.subr.mxu0 0.0
    %467 = vmatpush1.msra.mxu0 0.0
    %468 = vmatprep.subr.mxu0 0.0
    %469 = vmatpush1.msra.mxu0 0.0
    %470 = vmatprep.subr.mxu0 0.0
    %471 = vmatpush1.msra.mxu0 0.0
    %472 = vmatprep.subr.mxu0 0.0
    %473 = vmatpush1.msra.mxu0 0.0
    %474 = vmatprep.subr.mxu0 0.0
    %475 = vmatpush1.msra.mxu0 0.0
    %476 = vmatprep.mubr.f32.mxu0 0.0
    %477 = vmatmul.mubr.f32.gmra.mrb[0].mxu0 %v401
    %v478 = vpop.f32.mrb[0].mxu0
    %v479 = vadd.f32 0.0, %v478
    %v480 = vpop.f32.mrb[0].mxu0
    %481 = vmatprep.mubr.f32.mxu0 0.0
    %482 = vmatmul.mubr.f32.gmra.mrb[0].mxu0 %v404
    %v483 = vpop.f32.mrb[0].mxu0
    %v484 = vadd.f32 0.0, %v483
    %v485 = vpop.f32.mrb[0].mxu0
    %486 = vmatprep.mubr.f32.mxu0 0.0
    %487 = vmatmul.mubr.f32.gmra.mrb[0].mxu0 %v407
    %v488 = vpop.f32.mrb[0].mxu0
    %v489 = vadd.f32 0.0, %v488
    %v490 = vpop.f32.mrb[0].mxu0
    %491 = vdwg.mxu0
    %v492 = vadd.f32 %v211, %v479
    %v493 = vadd.f32 %v216, %v484
    %v494 = vadd.f32 %v221, %v489
    %v496 = vsel %vm48, %v393, 0
    %498 = vmatprep.subr.mxu0 0.0
    %499 = vmatpush1.msra.mxu0 %v496
    %500 = vmatprep.subr.mxu0 0.0
    %501 = vmatpush1.msra.mxu0 0.0
    %502 = vmatprep.subr.mxu0 0.0
    %503 = vmatpush1.msra.mxu0 0.0
    %504 = vmatprep.subr.mxu0 0.0
    %505 = vmatpush1.msra.mxu0 0.0
    %506 = vmatprep.subr.mxu0 0.0
    %507 = vmatpush1.msra.mxu0 0.0
    %508 = vmatprep.subr.mxu0 0.0
    %509 = vmatpush1.msra.mxu0 0.0
    %510 = vmatprep.subr.mxu0 0.0
    %511 = vmatpush1.msra.mxu0 0.0
    %512 = vmatprep.subr.mxu0 0.0
    %513 = vmatpush1.msra.mxu0 0.0
    %514 = vmatprep.subr.mxu0 0.0
    %515 = vmatpush1.msra.mxu0 0.0
    %516 = vmatprep.subr.mxu0 0.0
    %517 = vmatpush1.msra.mxu0 0.0
    %518 = vmatprep.subr.mxu0 0.0
    %519 = vmatpush1.msra.mxu0 0.0
    %520 = vmatprep.subr.mxu0 0.0
    %521 = vmatpush1.msra.mxu0 0.0
    %522 = vmatprep.subr.mxu0 0.0
    %523 = vmatpush1.msra.mxu0 0.0
    %524 = vmatprep.subr.mxu0 0.0
    %525 = vmatpush1.msra.mxu0 0.0
    %526 = vmatprep.subr.mxu0 0.0
    %527 = vmatpush1.msra.mxu0 0.0
    %528 = vmatprep.subr.mxu0 0.0
    %529 = vmatpush1.msra.mxu0 0.0
    %530 = vmatprep.subr.mxu0 0.0
    %531 = vmatpush1.msra.mxu0 0.0
    %532 = vmatprep.subr.mxu0 0.0
    %533 = vmatpush1.msra.mxu0 0.0
    %534 = vmatprep.subr.mxu0 0.0
    %535 = vmatpush1.msra.mxu0 0.0
    %536 = vmatprep.subr.mxu0 0.0
    %537 = vmatpush1.msra.mxu0 0.0
    %538 = vmatprep.subr.mxu0 0.0
    %539 = vmatpush1.msra.mxu0 0.0
    %540 = vmatprep.subr.mxu0 0.0
    %541 = vmatpush1.msra.mxu0 0.0
    %542 = vmatprep.subr.mxu0 0.0
    %543 = vmatpush1.msra.mxu0 0.0
    %544 = vmatprep.subr.mxu0 0.0
    %545 = vmatpush1.msra.mxu0 0.0
    %546 = vmatprep.subr.mxu0 0.0
    %547 = vmatpush1.msra.mxu0 0.0
    %548 = vmatprep.subr.mxu0 0.0
    %549 = vmatpush1.msra.mxu0 0.0
    %550 = vmatprep.subr.mxu0 0.0
    %551 = vmatpush1.msra.mxu0 0.0
    %552 = vmatprep.subr.mxu0 0.0
    %553 = vmatpush1.msra.mxu0 0.0
    %554 = vmatprep.subr.mxu0 0.0
    %555 = vmatpush1.msra.mxu0 0.0
    %556 = vmatprep.subr.mxu0 0.0
    %557 = vmatpush1.msra.mxu0 0.0
    %558 = vmatprep.subr.mxu0 0.0
    %559 = vmatpush1.msra.mxu0 0.0
    %560 = vmatprep.subr.mxu0 0.0
    %561 = vmatpush1.msra.mxu0 0.0
    %562 = vmatprep.mubr.f32.mxu0 0.0
    %563 = vmatmul.mubr.f32.gmra.mrb[0].mxu0 %v401
    %v564 = vpop.f32.mrb[0].mxu0
    %v565 = vadd.f32 0.0, %v564
    %v566 = vpop.f32.mrb[0].mxu0
    %567 = vmatprep.mubr.f32.mxu0 0.0
    %568 = vmatmul.mubr.f32.gmra.mrb[0].mxu0 %v404
    %v569 = vpop.f32.mrb[0].mxu0
    %v570 = vadd.f32 0.0, %v569
    %v571 = vpop.f32.mrb[0].mxu0
    %572 = vmatprep.mubr.f32.mxu0 0.0
    %573 = vmatmul.mubr.f32.gmra.mrb[0].mxu0 %v407
    %v574 = vpop.f32.mrb[0].mxu0
    %v575 = vadd.f32 0.0, %v574
    %v576 = vpop.f32.mrb[0].mxu0
    %577 = vdwg.mxu0
    %v578 = vadd.f32 %v377, %v565
    %v579 = vadd.f32 %v382, %v570
    %v580 = vadd.f32 %v387, %v575
    %s581 = scalar_lea.vmem %s1, 72
    %v582 = vld [vmem:[%s581] sm:$0xff]
    %v583 = vld [vmem:[%s581 + $0x8] sm:$0xff]
    %v584 = vld [vmem:[%s581 + $0x10] sm:$0xff]
    %v586 = vsel %vm25, %v582, 0
    %v589 = vsel %vm25, %v583, 0
    %v592 = vsel %vm25, %v584, 0
    %v594 = vsel %vm48, %v15, 0
    %596 = vmatprep.subr.mxu0 0.0
    %597 = vmatpush1.msra.mxu0 %v594
    %598 = vmatprep.subr.mxu0 0.0
    %599 = vmatpush1.msra.mxu0 0.0
    %600 = vmatprep.subr.mxu0 0.0
    %601 = vmatpush1.msra.mxu0 0.0
    %602 = vmatprep.subr.mxu0 0.0
    %603 = vmatpush1.msra.mxu0 0.0
    %604 = vmatprep.subr.mxu0 0.0
    %605 = vmatpush1.msra.mxu0 0.0
    %606 = vmatprep.subr.mxu0 0.0
    %607 = vmatpush1.msra.mxu0 0.0
    %608 = vmatprep.subr.mxu0 0.0
    %609 = vmatpush1.msra.mxu0 0.0
    %610 = vmatprep.subr.mxu0 0.0
    %611 = vmatpush1.msra.mxu0 0.0
    %612 = vmatprep.subr.mxu0 0.0
    %613 = vmatpush1.msra.mxu0 0.0
    %614 = vmatprep.subr.mxu0 0.0
    %615 = vmatpush1.msra.mxu0 0.0
    %616 = vmatprep.subr.mxu0 0.0
    %617 = vmatpush1.msra.mxu0 0.0
    %618 = vmatprep.subr.mxu0 0.0
    %619 = vmatpush1.msra.mxu0 0.0
    %620 = vmatprep.subr.mxu0 0.0
    %621 = vmatpush1.msra.mxu0 0.0
    %622 = vmatprep.subr.mxu0 0.0
    %623 = vmatpush1.msra.mxu0 0.0
    %624 = vmatprep.subr.mxu0 0.0
    %625 = vmatpush1.msra.mxu0 0.0
    %626 = vmatprep.subr.mxu0 0.0
    %627 = vmatpush1.msra.mxu0 0.0
    %628 = vmatprep.subr.mxu0 0.0
    %629 = vmatpush1.msra.mxu0 0.0
    %630 = vmatprep.subr.mxu0 0.0
    %631 = vmatpush1.msra.mxu0 0.0
    %632 = vmatprep.subr.mxu0 0.0
    %633 = vmatpush1.msra.mxu0 0.0
    %634 = vmatprep.subr.mxu0 0.0
    %635 = vmatpush1.msra.mxu0 0.0
    %636 = vmatprep.subr.mxu0 0.0
    %637 = vmatpush1.msra.mxu0 0.0
    %638 = vmatprep.subr.mxu0 0.0
    %639 = vmatpush1.msra.mxu0 0.0
    %640 = vmatprep.subr.mxu0 0.0
    %641 = vmatpush1.msra.mxu0 0.0
    %642 = vmatprep.subr.mxu0 0.0
    %643 = vmatpush1.msra.mxu0 0.0
    %644 = vmatprep.subr.mxu0 0.0
    %645 = vmatpush1.msra.mxu0 0.0
    %646 = vmatprep.subr.mxu0 0.0
    %647 = vmatpush1.msra.mxu0 0.0
    %648 = vmatprep.subr.mxu0 0.0
    %649 = vmatpush1.msra.mxu0 0.0
    %650 = vmatprep.subr.mxu0 0.0
    %651 = vmatpush1.msra.mxu0 0.0
    %652 = vmatprep.subr.mxu0 0.0
    %653 = vmatpush1.msra.mxu0 0.0
    %654 = vmatprep.subr.mxu0 0.0
    %655 = vmatpush1.msra.mxu0 0.0
    %656 = vmatprep.subr.mxu0 0.0
    %657 = vmatpush1.msra.mxu0 0.0
    %658 = vmatprep.subr.mxu0 0.0
    %659 = vmatpush1.msra.mxu0 0.0
    %660 = vmatprep.mubr.f32.mxu0 0.0
    %661 = vmatmul.mubr.f32.gmra.mrb[0].mxu0 %v586
    %v662 = vpop.f32.mrb[0].mxu0
    %v663 = vadd.f32 0.0, %v662
    %v664 = vpop.f32.mrb[0].mxu0
    %665 = vmatprep.mubr.f32.mxu0 0.0
    %666 = vmatmul.mubr.f32.gmra.mrb[0].mxu0 %v589
    %v667 = vpop.f32.mrb[0].mxu0
    %v668 = vadd.f32 0.0, %v667
    %v669 = vpop.f32.mrb[0].mxu0
    %670 = vmatprep.mubr.f32.mxu0 0.0
    %671 = vmatmul.mubr.f32.gmra.mrb[0].mxu0 %v592
    %v672 = vpop.f32.mrb[0].mxu0
    %v673 = vadd.f32 0.0, %v672
    %v674 = vpop.f32.mrb[0].mxu0
    %675 = vdwg.mxu0
    %v676 = vadd.f32 %v492, %v663
    %v677 = vadd.f32 %v493, %v668
    %v678 = vadd.f32 %v494, %v673
    %v679 = vsel %vm48, %v16, 0
    %681 = vmatprep.subr.mxu0 0.0
    %682 = vmatpush1.msra.mxu0 %v679
    %683 = vmatprep.subr.mxu0 0.0
    %684 = vmatpush1.msra.mxu0 0.0
    %685 = vmatprep.subr.mxu0 0.0
    %686 = vmatpush1.msra.mxu0 0.0
    %687 = vmatprep.subr.mxu0 0.0
    %688 = vmatpush1.msra.mxu0 0.0
    %689 = vmatprep.subr.mxu0 0.0
    %690 = vmatpush1.msra.mxu0 0.0
    %691 = vmatprep.subr.mxu0 0.0
    %692 = vmatpush1.msra.mxu0 0.0
    %693 = vmatprep.subr.mxu0 0.0
    %694 = vmatpush1.msra.mxu0 0.0
    %695 = vmatprep.subr.mxu0 0.0
    %696 = vmatpush1.msra.mxu0 0.0
    %697 = vmatprep.subr.mxu0 0.0
    %698 = vmatpush1.msra.mxu0 0.0
    %699 = vmatprep.subr.mxu0 0.0
    %700 = vmatpush1.msra.mxu0 0.0
    %701 = vmatprep.subr.mxu0 0.0
    %702 = vmatpush1.msra.mxu0 0.0
    %703 = vmatprep.subr.mxu0 0.0
    %704 = vmatpush1.msra.mxu0 0.0
    %705 = vmatprep.subr.mxu0 0.0
    %706 = vmatpush1.msra.mxu0 0.0
    %707 = vmatprep.subr.mxu0 0.0
    %708 = vmatpush1.msra.mxu0 0.0
    %709 = vmatprep.subr.mxu0 0.0
    %710 = vmatpush1.msra.mxu0 0.0
    %711 = vmatprep.subr.mxu0 0.0
    %712 = vmatpush1.msra.mxu0 0.0
    %713 = vmatprep.subr.mxu0 0.0
    %714 = vmatpush1.msra.mxu0 0.0
    %715 = vmatprep.subr.mxu0 0.0
    %716 = vmatpush1.msra.mxu0 0.0
    %717 = vmatprep.subr.mxu0 0.0
    %718 = vmatpush1.msra.mxu0 0.0
    %719 = vmatprep.subr.mxu0 0.0
    %720 = vmatpush1.msra.mxu0 0.0
    %721 = vmatprep.subr.mxu0 0.0
    %722 = vmatpush1.msra.mxu0 0.0
    %723 = vmatprep.subr.mxu0 0.0
    %724 = vmatpush1.msra.mxu0 0.0
    %725 = vmatprep.subr.mxu0 0.0
    %726 = vmatpush1.msra.mxu0 0.0
    %727 = vmatprep.subr.mxu0 0.0
    %728 = vmatpush1.msra.mxu0 0.0
    %729 = vmatprep.subr.mxu0 0.0
    %730 = vmatpush1.msra.mxu0 0.0
    %731 = vmatprep.subr.mxu0 0.0
    %732 = vmatpush1.msra.mxu0 0.0
    %733 = vmatprep.subr.mxu0 0.0
    %734 = vmatpush1.msra.mxu0 0.0
    %735 = vmatprep.subr.mxu0 0.0
    %736 = vmatpush1.msra.mxu0 0.0
    %737 = vmatprep.subr.mxu0 0.0
    %738 = vmatpush1.msra.mxu0 0.0
    %739 = vmatprep.subr.mxu0 0.0
    %740 = vmatpush1.msra.mxu0 0.0
    %741 = vmatprep.subr.mxu0 0.0
    %742 = vmatpush1.msra.mxu0 0.0
    %743 = vmatprep.subr.mxu0 0.0
    %744 = vmatpush1.msra.mxu0 0.0
    %745 = vmatprep.mubr.f32.mxu0 0.0
    %746 = vmatmul.mubr.f32.gmra.mrb[0].mxu0 %v586
    %v747 = vpop.f32.mrb[0].mxu0
    %v748 = vadd.f32 0.0, %v747
    %v749 = vpop.f32.mrb[0].mxu0
    %750 = vmatprep.mubr.f32.mxu0 0.0
    %751 = vmatmul.mubr.f32.gmra.mrb[0].mxu0 %v589
    %v752 = vpop.f32.mrb[0].mxu0
    %v753 = vadd.f32 0.0, %v752
    %v754 = vpop.f32.mrb[0].mxu0
    %755 = vmatprep.mubr.f32.mxu0 0.0
    %756 = vmatmul.mubr.f32.gmra.mrb[0].mxu0 %v592
    %v757 = vpop.f32.mrb[0].mxu0
    %v758 = vadd.f32 0.0, %v757
    %v759 = vpop.f32.mrb[0].mxu0
    %760 = vdwg.mxu0
    %v761 = vadd.f32 %v578, %v748
    %v762 = vadd.f32 %v579, %v753
    %v763 = vadd.f32 %v580, %v758
    %764 = vrot.lane.b32.xlu0 %v15, 127
    %v765 = vpop.permute.xlu0 %764
    %766 = vrot.lane.b32.xlu0 %v16, 127
    %v767 = vpop.permute.xlu0 %766
    %s770 = scalar_lea.vmem %s1, 96
    %v771 = vld [vmem:[%s770] sm:$0xff]
    %v772 = vld [vmem:[%s770 + $0x8] sm:$0xff]
    %v773 = vld [vmem:[%s770 + $0x10] sm:$0xff]
    %v775 = vsel %vm25, %v771, 0
    %v778 = vsel %vm25, %v772, 0
    %v781 = vsel %vm25, %v773, 0
    %v784 = vsel %vm48, %v765, 0
    %786 = vmatprep.subr.mxu0 0.0
    %787 = vmatpush1.msra.mxu0 %v784
    %788 = vmatprep.subr.mxu0 0.0
    %789 = vmatpush1.msra.mxu0 0.0
    %790 = vmatprep.subr.mxu0 0.0
    %791 = vmatpush1.msra.mxu0 0.0
    %792 = vmatprep.subr.mxu0 0.0
    %793 = vmatpush1.msra.mxu0 0.0
    %794 = vmatprep.subr.mxu0 0.0
    %795 = vmatpush1.msra.mxu0 0.0
    %796 = vmatprep.subr.mxu0 0.0
    %797 = vmatpush1.msra.mxu0 0.0
    %798 = vmatprep.subr.mxu0 0.0
    %799 = vmatpush1.msra.mxu0 0.0
    %800 = vmatprep.subr.mxu0 0.0
    %801 = vmatpush1.msra.mxu0 0.0
    %802 = vmatprep.subr.mxu0 0.0
    %803 = vmatpush1.msra.mxu0 0.0
    %804 = vmatprep.subr.mxu0 0.0
    %805 = vmatpush1.msra.mxu0 0.0
    %806 = vmatprep.subr.mxu0 0.0
    %807 = vmatpush1.msra.mxu0 0.0
    %808 = vmatprep.subr.mxu0 0.0
    %809 = vmatpush1.msra.mxu0 0.0
    %810 = vmatprep.subr.mxu0 0.0
    %811 = vmatpush1.msra.mxu0 0.0
    %812 = vmatprep.subr.mxu0 0.0
    %813 = vmatpush1.msra.mxu0 0.0
    %814 = vmatprep.subr.mxu0 0.0
    %815 = vmatpush1.msra.mxu0 0.0
    %816 = vmatprep.subr.mxu0 0.0
    %817 = vmatpush1.msra.mxu0 0.0
    %818 = vmatprep.subr.mxu0 0.0
    %819 = vmatpush1.msra.mxu0 0.0
    %820 = vmatprep.subr.mxu0 0.0
    %821 = vmatpush1.msra.mxu0 0.0
    %822 = vmatprep.subr.mxu0 0.0
    %823 = vmatpush1.msra.mxu0 0.0
    %824 = vmatprep.subr.mxu0 0.0
    %825 = vmatpush1.msra.mxu0 0.0
    %826 = vmatprep.subr.mxu0 0.0
    %827 = vmatpush1.msra.mxu0 0.0
    %828 = vmatprep.subr.mxu0 0.0
    %829 = vmatpush1.msra.mxu0 0.0
    %830 = vmatprep.subr.mxu0 0.0
    %831 = vmatpush1.msra.mxu0 0.0
    %832 = vmatprep.subr.mxu0 0.0
    %833 = vmatpush1.msra.mxu0 0.0
    %834 = vmatprep.subr.mxu0 0.0
    %835 = vmatpush1.msra.mxu0 0.0
    %836 = vmatprep.subr.mxu0 0.0
    %837 = vmatpush1.msra.mxu0 0.0
    %838 = vmatprep.subr.mxu0 0.0
    %839 = vmatpush1.msra.mxu0 0.0
    %840 = vmatprep.subr.mxu0 0.0
    %841 = vmatpush1.msra.mxu0 0.0
    %842 = vmatprep.subr.mxu0 0.0
    %843 = vmatpush1.msra.mxu0 0.0
    %844 = vmatprep.subr.mxu0 0.0
    %845 = vmatpush1.msra.mxu0 0.0
    %846 = vmatprep.subr.mxu0 0.0
    %847 = vmatpush1.msra.mxu0 0.0
    %848 = vmatprep.subr.mxu0 0.0
    %849 = vmatpush1.msra.mxu0 0.0
    %850 = vmatprep.mubr.f32.mxu0 0.0
    %851 = vmatmul.mubr.f32.gmra.mrb[0].mxu0 %v775
    %v852 = vpop.f32.mrb[0].mxu0
    %v853 = vadd.f32 0.0, %v852
    %v854 = vpop.f32.mrb[0].mxu0
    %855 = vmatprep.mubr.f32.mxu0 0.0
    %856 = vmatmul.mubr.f32.gmra.mrb[0].mxu0 %v778
    %v857 = vpop.f32.mrb[0].mxu0
    %v858 = vadd.f32 0.0, %v857
    %v859 = vpop.f32.mrb[0].mxu0
    %860 = vmatprep.mubr.f32.mxu0 0.0
    %861 = vmatmul.mubr.f32.gmra.mrb[0].mxu0 %v781
    %v862 = vpop.f32.mrb[0].mxu0
    %v863 = vadd.f32 0.0, %v862
    %v864 = vpop.f32.mrb[0].mxu0
    %865 = vdwg.mxu0
    %v866 = vadd.f32 %v676, %v853
    %v867 = vadd.f32 %v677, %v858
    %v868 = vadd.f32 %v678, %v863
    %v870 = vsel %vm48, %v767, 0
    %872 = vmatprep.subr.mxu0 0.0
    %873 = vmatpush1.msra.mxu0 %v870
    %874 = vmatprep.subr.mxu0 0.0
    %875 = vmatpush1.msra.mxu0 0.0
    %876 = vmatprep.subr.mxu0 0.0
    %877 = vmatpush1.msra.mxu0 0.0
    %878 = vmatprep.subr.mxu0 0.0
    %879 = vmatpush1.msra.mxu0 0.0
    %880 = vmatprep.subr.mxu0 0.0
    %881 = vmatpush1.msra.mxu0 0.0
    %882 = vmatprep.subr.mxu0 0.0
    %883 = vmatpush1.msra.mxu0 0.0
    %884 = vmatprep.subr.mxu0 0.0
    %885 = vmatpush1.msra.mxu0 0.0
    %886 = vmatprep.subr.mxu0 0.0
    %887 = vmatpush1.msra.mxu0 0.0
    %888 = vmatprep.subr.mxu0 0.0
    %889 = vmatpush1.msra.mxu0 0.0
    %890 = vmatprep.subr.mxu0 0.0
    %891 = vmatpush1.msra.mxu0 0.0
    %892 = vmatprep.subr.mxu0 0.0
    %893 = vmatpush1.msra.mxu0 0.0
    %894 = vmatprep.subr.mxu0 0.0
    %895 = vmatpush1.msra.mxu0 0.0
    %896 = vmatprep.subr.mxu0 0.0
    %897 = vmatpush1.msra.mxu0 0.0
    %898 = vmatprep.subr.mxu0 0.0
    %899 = vmatpush1.msra.mxu0 0.0
    %900 = vmatprep.subr.mxu0 0.0
    %901 = vmatpush1.msra.mxu0 0.0
    %902 = vmatprep.subr.mxu0 0.0
    %903 = vmatpush1.msra.mxu0 0.0
    %904 = vmatprep.subr.mxu0 0.0
    %905 = vmatpush1.msra.mxu0 0.0
    %906 = vmatprep.subr.mxu0 0.0
    %907 = vmatpush1.msra.mxu0 0.0
    %908 = vmatprep.subr.mxu0 0.0
    %909 = vmatpush1.msra.mxu0 0.0
    %910 = vmatprep.subr.mxu0 0.0
    %911 = vmatpush1.msra.mxu0 0.0
    %912 = vmatprep.subr.mxu0 0.0
    %913 = vmatpush1.msra.mxu0 0.0
    %914 = vmatprep.subr.mxu0 0.0
    %915 = vmatpush1.msra.mxu0 0.0
    %916 = vmatprep.subr.mxu0 0.0
    %917 = vmatpush1.msra.mxu0 0.0
    %918 = vmatprep.subr.mxu0 0.0
    %919 = vmatpush1.msra.mxu0 0.0
    %920 = vmatprep.subr.mxu0 0.0
    %921 = vmatpush1.msra.mxu0 0.0
    %922 = vmatprep.subr.mxu0 0.0
    %923 = vmatpush1.msra.mxu0 0.0
    %924 = vmatprep.subr.mxu0 0.0
    %925 = vmatpush1.msra.mxu0 0.0
    %926 = vmatprep.subr.mxu0 0.0
    %927 = vmatpush1.msra.mxu0 0.0
    %928 = vmatprep.subr.mxu0 0.0
    %929 = vmatpush1.msra.mxu0 0.0
    %930 = vmatprep.subr.mxu0 0.0
    %931 = vmatpush1.msra.mxu0 0.0
    %932 = vmatprep.subr.mxu0 0.0
    %933 = vmatpush1.msra.mxu0 0.0
    %934 = vmatprep.subr.mxu0 0.0
    %935 = vmatpush1.msra.mxu0 0.0
    %936 = vmatprep.mubr.f32.mxu0 0.0
    %937 = vmatmul.mubr.f32.gmra.mrb[0].mxu0 %v775
    %v938 = vpop.f32.mrb[0].mxu0
    %v939 = vadd.f32 0.0, %v938
    %v940 = vpop.f32.mrb[0].mxu0
    %941 = vmatprep.mubr.f32.mxu0 0.0
    %942 = vmatmul.mubr.f32.gmra.mrb[0].mxu0 %v778
    %v943 = vpop.f32.mrb[0].mxu0
    %v944 = vadd.f32 0.0, %v943
    %v945 = vpop.f32.mrb[0].mxu0
    %946 = vmatprep.mubr.f32.mxu0 0.0
    %947 = vmatmul.mubr.f32.gmra.mrb[0].mxu0 %v781
    %v948 = vpop.f32.mrb[0].mxu0
    %v949 = vadd.f32 0.0, %v948
    %v950 = vpop.f32.mrb[0].mxu0
    %951 = vdwg.mxu0
    %v952 = vadd.f32 %v761, %v939
    %v953 = vadd.f32 %v762, %v944
    %v954 = vadd.f32 %v763, %v949
    %955 = vrot.lane.b32.xlu0 %v15, 126
    %v956 = vpop.permute.xlu0 %955
    %957 = vrot.lane.b32.xlu0 %v16, 126
    %v958 = vpop.permute.xlu0 %957
    %s961 = scalar_lea.vmem %s1, 120
    %v962 = vld [vmem:[%s961] sm:$0xff]
    %v963 = vld [vmem:[%s961 + $0x8] sm:$0xff]
    %v964 = vld [vmem:[%s961 + $0x10] sm:$0xff]
    %v966 = vsel %vm25, %v962, 0
    %v969 = vsel %vm25, %v963, 0
    %v972 = vsel %vm25, %v964, 0
    %v975 = vsel %vm48, %v956, 0
    %977 = vmatprep.subr.mxu0 0.0
    %978 = vmatpush1.msra.mxu0 %v975
    %979 = vmatprep.subr.mxu0 0.0
    %980 = vmatpush1.msra.mxu0 0.0
    %981 = vmatprep.subr.mxu0 0.0
    %982 = vmatpush1.msra.mxu0 0.0
    %983 = vmatprep.subr.mxu0 0.0
    %984 = vmatpush1.msra.mxu0 0.0
    %985 = vmatprep.subr.mxu0 0.0
    %986 = vmatpush1.msra.mxu0 0.0
    %987 = vmatprep.subr.mxu0 0.0
    %988 = vmatpush1.msra.mxu0 0.0
    %989 = vmatprep.subr.mxu0 0.0
    %990 = vmatpush1.msra.mxu0 0.0
    %991 = vmatprep.subr.mxu0 0.0
    %992 = vmatpush1.msra.mxu0 0.0
    %993 = vmatprep.subr.mxu0 0.0
    %994 = vmatpush1.msra.mxu0 0.0
    %995 = vmatprep.subr.mxu0 0.0
    %996 = vmatpush1.msra.mxu0 0.0
    %997 = vmatprep.subr.mxu0 0.0
    %998 = vmatpush1.msra.mxu0 0.0
    %999 = vmatprep.subr.mxu0 0.0
    %1000 = vmatpush1.msra.mxu0 0.0
    %1001 = vmatprep.subr.mxu0 0.0
    %1002 = vmatpush1.msra.mxu0 0.0
    %1003 = vmatprep.subr.mxu0 0.0
    %1004 = vmatpush1.msra.mxu0 0.0
    %1005 = vmatprep.subr.mxu0 0.0
    %1006 = vmatpush1.msra.mxu0 0.0
    %1007 = vmatprep.subr.mxu0 0.0
    %1008 = vmatpush1.msra.mxu0 0.0
    %1009 = vmatprep.subr.mxu0 0.0
    %1010 = vmatpush1.msra.mxu0 0.0
    %1011 = vmatprep.subr.mxu0 0.0
    %1012 = vmatpush1.msra.mxu0 0.0
    %1013 = vmatprep.subr.mxu0 0.0
    %1014 = vmatpush1.msra.mxu0 0.0
    %1015 = vmatprep.subr.mxu0 0.0
    %1016 = vmatpush1.msra.mxu0 0.0
    %1017 = vmatprep.subr.mxu0 0.0
    %1018 = vmatpush1.msra.mxu0 0.0
    %1019 = vmatprep.subr.mxu0 0.0
    %1020 = vmatpush1.msra.mxu0 0.0
    %1021 = vmatprep.subr.mxu0 0.0
    %1022 = vmatpush1.msra.mxu0 0.0
    %1023 = vmatprep.subr.mxu0 0.0
    %1024 = vmatpush1.msra.mxu0 0.0
    %1025 = vmatprep.subr.mxu0 0.0
    %1026 = vmatpush1.msra.mxu0 0.0
    %1027 = vmatprep.subr.mxu0 0.0
    %1028 = vmatpush1.msra.mxu0 0.0
    %1029 = vmatprep.subr.mxu0 0.0
    %1030 = vmatpush1.msra.mxu0 0.0
    %1031 = vmatprep.subr.mxu0 0.0
    %1032 = vmatpush1.msra.mxu0 0.0
    %1033 = vmatprep.subr.mxu0 0.0
    %1034 = vmatpush1.msra.mxu0 0.0
    %1035 = vmatprep.subr.mxu0 0.0
    %1036 = vmatpush1.msra.mxu0 0.0
    %1037 = vmatprep.subr.mxu0 0.0
    %1038 = vmatpush1.msra.mxu0 0.0
    %1039 = vmatprep.subr.mxu0 0.0
    %1040 = vmatpush1.msra.mxu0 0.0
    %1041 = vmatprep.mubr.f32.mxu0 0.0
    %1042 = vmatmul.mubr.f32.gmra.mrb[0].mxu0 %v966
    %v1043 = vpop.f32.mrb[0].mxu0
    %v1044 = vadd.f32 0.0, %v1043
    %v1045 = vpop.f32.mrb[0].mxu0
    %1046 = vmatprep.mubr.f32.mxu0 0.0
    %1047 = vmatmul.mubr.f32.gmra.mrb[0].mxu0 %v969
    %v1048 = vpop.f32.mrb[0].mxu0
    %v1049 = vadd.f32 0.0, %v1048
    %v1050 = vpop.f32.mrb[0].mxu0
    %1051 = vmatprep.mubr.f32.mxu0 0.0
    %1052 = vmatmul.mubr.f32.gmra.mrb[0].mxu0 %v972
    %v1053 = vpop.f32.mrb[0].mxu0
    %v1054 = vadd.f32 0.0, %v1053
    %v1055 = vpop.f32.mrb[0].mxu0
    %1056 = vdwg.mxu0
    %v1057 = vadd.f32 %v866, %v1044
    %v1058 = vadd.f32 %v867, %v1049
    %v1059 = vadd.f32 %v868, %v1054
    %v1061 = vsel %vm48, %v958, 0
    %1063 = vmatprep.subr.mxu0 0.0
    %1064 = vmatpush1.msra.mxu0 %v1061
    %1065 = vmatprep.subr.mxu0 0.0
    %1066 = vmatpush1.msra.mxu0 0.0
    %1067 = vmatprep.subr.mxu0 0.0
    %1068 = vmatpush1.msra.mxu0 0.0
    %1069 = vmatprep.subr.mxu0 0.0
    %1070 = vmatpush1.msra.mxu0 0.0
    %1071 = vmatprep.subr.mxu0 0.0
    %1072 = vmatpush1.msra.mxu0 0.0
    %1073 = vmatprep.subr.mxu0 0.0
    %1074 = vmatpush1.msra.mxu0 0.0
    %1075 = vmatprep.subr.mxu0 0.0
    %1076 = vmatpush1.msra.mxu0 0.0
    %1077 = vmatprep.subr.mxu0 0.0
    %1078 = vmatpush1.msra.mxu0 0.0
    %1079 = vmatprep.subr.mxu0 0.0
    %1080 = vmatpush1.msra.mxu0 0.0
    %1081 = vmatprep.subr.mxu0 0.0
    %1082 = vmatpush1.msra.mxu0 0.0
    %1083 = vmatprep.subr.mxu0 0.0
    %1084 = vmatpush1.msra.mxu0 0.0
    %1085 = vmatprep.subr.mxu0 0.0
    %1086 = vmatpush1.msra.mxu0 0.0
    %1087 = vmatprep.subr.mxu0 0.0
    %1088 = vmatpush1.msra.mxu0 0.0
    %1089 = vmatprep.subr.mxu0 0.0
    %1090 = vmatpush1.msra.mxu0 0.0
    %1091 = vmatprep.subr.mxu0 0.0
    %1092 = vmatpush1.msra.mxu0 0.0
    %1093 = vmatprep.subr.mxu0 0.0
    %1094 = vmatpush1.msra.mxu0 0.0
    %1095 = vmatprep.subr.mxu0 0.0
    %1096 = vmatpush1.msra.mxu0 0.0
    %1097 = vmatprep.subr.mxu0 0.0
    %1098 = vmatpush1.msra.mxu0 0.0
    %1099 = vmatprep.subr.mxu0 0.0
    %1100 = vmatpush1.msra.mxu0 0.0
    %1101 = vmatprep.subr.mxu0 0.0
    %1102 = vmatpush1.msra.mxu0 0.0
    %1103 = vmatprep.subr.mxu0 0.0
    %1104 = vmatpush1.msra.mxu0 0.0
    %1105 = vmatprep.subr.mxu0 0.0
    %1106 = vmatpush1.msra.mxu0 0.0
    %1107 = vmatprep.subr.mxu0 0.0
    %1108 = vmatpush1.msra.mxu0 0.0
    %1109 = vmatprep.subr.mxu0 0.0
    %1110 = vmatpush1.msra.mxu0 0.0
    %1111 = vmatprep.subr.mxu0 0.0
    %1112 = vmatpush1.msra.mxu0 0.0
    %1113 = vmatprep.subr.mxu0 0.0
    %1114 = vmatpush1.msra.mxu0 0.0
    %1115 = vmatprep.subr.mxu0 0.0
    %1116 = vmatpush1.msra.mxu0 0.0
    %1117 = vmatprep.subr.mxu0 0.0
    %1118 = vmatpush1.msra.mxu0 0.0
    %1119 = vmatprep.subr.mxu0 0.0
    %1120 = vmatpush1.msra.mxu0 0.0
    %1121 = vmatprep.subr.mxu0 0.0
    %1122 = vmatpush1.msra.mxu0 0.0
    %1123 = vmatprep.subr.mxu0 0.0
    %1124 = vmatpush1.msra.mxu0 0.0
    %1125 = vmatprep.subr.mxu0 0.0
    %1126 = vmatpush1.msra.mxu0 0.0
    %1127 = vmatprep.mubr.f32.mxu0 0.0
    %1128 = vmatmul.mubr.f32.gmra.mrb[0].mxu0 %v966
    %v1129 = vpop.f32.mrb[0].mxu0
    %v1130 = vadd.f32 0.0, %v1129
    %v1131 = vpop.f32.mrb[0].mxu0
    %1132 = vmatprep.mubr.f32.mxu0 0.0
    %1133 = vmatmul.mubr.f32.gmra.mrb[0].mxu0 %v969
    %v1134 = vpop.f32.mrb[0].mxu0
    %v1135 = vadd.f32 0.0, %v1134
    %v1136 = vpop.f32.mrb[0].mxu0
    %1137 = vmatprep.mubr.f32.mxu0 0.0
    %1138 = vmatmul.mubr.f32.gmra.mrb[0].mxu0 %v972
    %v1139 = vpop.f32.mrb[0].mxu0
    %v1140 = vadd.f32 0.0, %v1139
    %v1141 = vpop.f32.mrb[0].mxu0
    %1142 = vdwg.mxu0
    %v1143 = vadd.f32 %v952, %v1130
    %v1144 = vadd.f32 %v953, %v1135
    %v1145 = vadd.f32 %v954, %v1140
    %1146 = vrot.lane.b32.xlu0 %v15, 124
    %v1147 = vpop.permute.xlu0 %1146
    %1148 = vrot.lane.b32.xlu0 %v16, 124
    %v1149 = vpop.permute.xlu0 %1148
    %s1152 = scalar_lea.vmem %s1, 144
    %v1153 = vld [vmem:[%s1152] sm:$0xff]
    %v1154 = vld [vmem:[%s1152 + $0x8] sm:$0xff]
    %v1155 = vld [vmem:[%s1152 + $0x10] sm:$0xff]
    %v1157 = vsel %vm25, %v1153, 0
    %v1160 = vsel %vm25, %v1154, 0
    %v1163 = vsel %vm25, %v1155, 0
    %v1166 = vsel %vm48, %v1147, 0
    %1168 = vmatprep.subr.mxu0 0.0
    %1169 = vmatpush1.msra.mxu0 %v1166
    %1170 = vmatprep.subr.mxu0 0.0
    %1171 = vmatpush1.msra.mxu0 0.0
    %1172 = vmatprep.subr.mxu0 0.0
    %1173 = vmatpush1.msra.mxu0 0.0
    %1174 = vmatprep.subr.mxu0 0.0
    %1175 = vmatpush1.msra.mxu0 0.0
    %1176 = vmatprep.subr.mxu0 0.0
    %1177 = vmatpush1.msra.mxu0 0.0
    %1178 = vmatprep.subr.mxu0 0.0
    %1179 = vmatpush1.msra.mxu0 0.0
    %1180 = vmatprep.subr.mxu0 0.0
    %1181 = vmatpush1.msra.mxu0 0.0
    %1182 = vmatprep.subr.mxu0 0.0
    %1183 = vmatpush1.msra.mxu0 0.0
    %1184 = vmatprep.subr.mxu0 0.0
    %1185 = vmatpush1.msra.mxu0 0.0
    %1186 = vmatprep.subr.mxu0 0.0
    %1187 = vmatpush1.msra.mxu0 0.0
    %1188 = vmatprep.subr.mxu0 0.0
    %1189 = vmatpush1.msra.mxu0 0.0
    %1190 = vmatprep.subr.mxu0 0.0
    %1191 = vmatpush1.msra.mxu0 0.0
    %1192 = vmatprep.subr.mxu0 0.0
    %1193 = vmatpush1.msra.mxu0 0.0
    %1194 = vmatprep.subr.mxu0 0.0
    %1195 = vmatpush1.msra.mxu0 0.0
    %1196 = vmatprep.subr.mxu0 0.0
    %1197 = vmatpush1.msra.mxu0 0.0
    %1198 = vmatprep.subr.mxu0 0.0
    %1199 = vmatpush1.msra.mxu0 0.0
    %1200 = vmatprep.subr.mxu0 0.0
    %1201 = vmatpush1.msra.mxu0 0.0
    %1202 = vmatprep.subr.mxu0 0.0
    %1203 = vmatpush1.msra.mxu0 0.0
    %1204 = vmatprep.subr.mxu0 0.0
    %1205 = vmatpush1.msra.mxu0 0.0
    %1206 = vmatprep.subr.mxu0 0.0
    %1207 = vmatpush1.msra.mxu0 0.0
    %1208 = vmatprep.subr.mxu0 0.0
    %1209 = vmatpush1.msra.mxu0 0.0
    %1210 = vmatprep.subr.mxu0 0.0
    %1211 = vmatpush1.msra.mxu0 0.0
    %1212 = vmatprep.subr.mxu0 0.0
    %1213 = vmatpush1.msra.mxu0 0.0
    %1214 = vmatprep.subr.mxu0 0.0
    %1215 = vmatpush1.msra.mxu0 0.0
    %1216 = vmatprep.subr.mxu0 0.0
    %1217 = vmatpush1.msra.mxu0 0.0
    %1218 = vmatprep.subr.mxu0 0.0
    %1219 = vmatpush1.msra.mxu0 0.0
    %1220 = vmatprep.subr.mxu0 0.0
    %1221 = vmatpush1.msra.mxu0 0.0
    %1222 = vmatprep.subr.mxu0 0.0
    %1223 = vmatpush1.msra.mxu0 0.0
    %1224 = vmatprep.subr.mxu0 0.0
    %1225 = vmatpush1.msra.mxu0 0.0
    %1226 = vmatprep.subr.mxu0 0.0
    %1227 = vmatpush1.msra.mxu0 0.0
    %1228 = vmatprep.subr.mxu0 0.0
    %1229 = vmatpush1.msra.mxu0 0.0
    %1230 = vmatprep.subr.mxu0 0.0
    %1231 = vmatpush1.msra.mxu0 0.0
    %1232 = vmatprep.mubr.f32.mxu0 0.0
    %1233 = vmatmul.mubr.f32.gmra.mrb[0].mxu0 %v1157
    %v1234 = vpop.f32.mrb[0].mxu0
    %v1235 = vadd.f32 0.0, %v1234
    %v1236 = vpop.f32.mrb[0].mxu0
    %1237 = vmatprep.mubr.f32.mxu0 0.0
    %1238 = vmatmul.mubr.f32.gmra.mrb[0].mxu0 %v1160
    %v1239 = vpop.f32.mrb[0].mxu0
    %v1240 = vadd.f32 0.0, %v1239
    %v1241 = vpop.f32.mrb[0].mxu0
    %1242 = vmatprep.mubr.f32.mxu0 0.0
    %1243 = vmatmul.mubr.f32.gmra.mrb[0].mxu0 %v1163
    %v1244 = vpop.f32.mrb[0].mxu0
    %v1245 = vadd.f32 0.0, %v1244
    %v1246 = vpop.f32.mrb[0].mxu0
    %1247 = vdwg.mxu0
    %v1248 = vadd.f32 %v1057, %v1235
    %v1249 = vadd.f32 %v1058, %v1240
    %v1250 = vadd.f32 %v1059, %v1245
    %v1252 = vsel %vm48, %v1149, 0
    %1254 = vmatprep.subr.mxu0 0.0
    %1255 = vmatpush1.msra.mxu0 %v1252
    %1256 = vmatprep.subr.mxu0 0.0
    %1257 = vmatpush1.msra.mxu0 0.0
    %1258 = vmatprep.subr.mxu0 0.0
    %1259 = vmatpush1.msra.mxu0 0.0
    %1260 = vmatprep.subr.mxu0 0.0
    %1261 = vmatpush1.msra.mxu0 0.0
    %1262 = vmatprep.subr.mxu0 0.0
    %1263 = vmatpush1.msra.mxu0 0.0
    %1264 = vmatprep.subr.mxu0 0.0
    %1265 = vmatpush1.msra.mxu0 0.0
    %1266 = vmatprep.subr.mxu0 0.0
    %1267 = vmatpush1.msra.mxu0 0.0
    %1268 = vmatprep.subr.mxu0 0.0
    %1269 = vmatpush1.msra.mxu0 0.0
    %1270 = vmatprep.subr.mxu0 0.0
    %1271 = vmatpush1.msra.mxu0 0.0
    %1272 = vmatprep.subr.mxu0 0.0
    %1273 = vmatpush1.msra.mxu0 0.0
    %1274 = vmatprep.subr.mxu0 0.0
    %1275 = vmatpush1.msra.mxu0 0.0
    %1276 = vmatprep.subr.mxu0 0.0
    %1277 = vmatpush1.msra.mxu0 0.0
    %1278 = vmatprep.subr.mxu0 0.0
    %1279 = vmatpush1.msra.mxu0 0.0
    %1280 = vmatprep.subr.mxu0 0.0
    %1281 = vmatpush1.msra.mxu0 0.0
    %1282 = vmatprep.subr.mxu0 0.0
    %1283 = vmatpush1.msra.mxu0 0.0
    %1284 = vmatprep.subr.mxu0 0.0
    %1285 = vmatpush1.msra.mxu0 0.0
    %1286 = vmatprep.subr.mxu0 0.0
    %1287 = vmatpush1.msra.mxu0 0.0
    %1288 = vmatprep.subr.mxu0 0.0
    %1289 = vmatpush1.msra.mxu0 0.0
    %1290 = vmatprep.subr.mxu0 0.0
    %1291 = vmatpush1.msra.mxu0 0.0
    %1292 = vmatprep.subr.mxu0 0.0
    %1293 = vmatpush1.msra.mxu0 0.0
    %1294 = vmatprep.subr.mxu0 0.0
    %1295 = vmatpush1.msra.mxu0 0.0
    %1296 = vmatprep.subr.mxu0 0.0
    %1297 = vmatpush1.msra.mxu0 0.0
    %1298 = vmatprep.subr.mxu0 0.0
    %1299 = vmatpush1.msra.mxu0 0.0
    %1300 = vmatprep.subr.mxu0 0.0
    %1301 = vmatpush1.msra.mxu0 0.0
    %1302 = vmatprep.subr.mxu0 0.0
    %1303 = vmatpush1.msra.mxu0 0.0
    %1304 = vmatprep.subr.mxu0 0.0
    %1305 = vmatpush1.msra.mxu0 0.0
    %1306 = vmatprep.subr.mxu0 0.0
    %1307 = vmatpush1.msra.mxu0 0.0
    %1308 = vmatprep.subr.mxu0 0.0
    %1309 = vmatpush1.msra.mxu0 0.0
    %1310 = vmatprep.subr.mxu0 0.0
    %1311 = vmatpush1.msra.mxu0 0.0
    %1312 = vmatprep.subr.mxu0 0.0
    %1313 = vmatpush1.msra.mxu0 0.0
    %1314 = vmatprep.subr.mxu0 0.0
    %1315 = vmatpush1.msra.mxu0 0.0
    %1316 = vmatprep.subr.mxu0 0.0
    %1317 = vmatpush1.msra.mxu0 0.0
    %1318 = vmatprep.mubr.f32.mxu0 0.0
    %1319 = vmatmul.mubr.f32.gmra.mrb[0].mxu0 %v1157
    %v1320 = vpop.f32.mrb[0].mxu0
    %v1321 = vadd.f32 0.0, %v1320
    %v1322 = vpop.f32.mrb[0].mxu0
    %1323 = vmatprep.mubr.f32.mxu0 0.0
    %1324 = vmatmul.mubr.f32.gmra.mrb[0].mxu0 %v1160
    %v1325 = vpop.f32.mrb[0].mxu0
    %v1326 = vadd.f32 0.0, %v1325
    %v1327 = vpop.f32.mrb[0].mxu0
    %1328 = vmatprep.mubr.f32.mxu0 0.0
    %1329 = vmatmul.mubr.f32.gmra.mrb[0].mxu0 %v1163
    %v1330 = vpop.f32.mrb[0].mxu0
    %v1331 = vadd.f32 0.0, %v1330
    %v1332 = vpop.f32.mrb[0].mxu0
    %1333 = vdwg.mxu0
    %v1334 = vadd.f32 %v1143, %v1321
    %v1335 = vadd.f32 %v1144, %v1326
    %v1336 = vadd.f32 %v1145, %v1331
    %1337 = vadd.xlane.f32.xlu0 %v1248
    %v1338 = vpop.xlane.xlu0 %1337
    %1339 = vadd.xlane.f32.xlu0 %v1249
    %v1340 = vpop.xlane.xlu0 %1339
    %1341 = vadd.xlane.f32.xlu0 %v1250
    %v1342 = vpop.xlane.xlu0 %1341
    %1343 = vadd.xlane.f32.xlu0 %v1334
    %v1344 = vpop.xlane.xlu0 %1343
    %1345 = vadd.xlane.f32.xlu0 %v1335
    %v1346 = vpop.xlane.xlu0 %1345
    %1347 = vadd.xlane.f32.xlu0 %v1336
    %v1348 = vpop.xlane.xlu0 %1347
    %v1349 = vadd.f32 %v1338, %v1344
    %v1350 = vadd.f32 %v1340, %v1346
    %v1351 = vadd.f32 %v1342, %v1348
    %v1352 = vrcp.pop 256.0
    %v1353 = vmul.f32 %v1349, %v1352
    %v1354 = vmul.f32 %v1350, %v1352
    %v1355 = vmul.f32 %v1351, %v1352
    %v1356 = vsub.f32 %v1248, %v1353
    %v1357 = vsub.f32 %v1249, %v1354
    %v1358 = vsub.f32 %v1250, %v1355
    %v1359 = vmul.f32 %v1356, %v1356
    %v1360 = vmul.f32 %v1357, %v1357
    %v1361 = vmul.f32 %v1358, %v1358
    %1362 = vadd.xlane.f32.xlu0 %v1359
    %v1363 = vpop.xlane.xlu0 %1362
    %1364 = vadd.xlane.f32.xlu0 %v1360
    %v1365 = vpop.xlane.xlu0 %1364
    %1366 = vadd.xlane.f32.xlu0 %v1361
    %v1367 = vpop.xlane.xlu0 %1366
    %v1368 = vadd.f32 %v1363, 0.0
    %v1369 = vadd.f32 %v1365, 0.0
    %v1370 = vadd.f32 %v1367, 0.0
    %v1371 = vsub.f32 %v1334, %v1353
    %v1372 = vsub.f32 %v1335, %v1354
    %v1373 = vsub.f32 %v1336, %v1355
    %v1374 = vmul.f32 %v1371, %v1371
    %v1375 = vmul.f32 %v1372, %v1372
    %v1376 = vmul.f32 %v1373, %v1373
    %1377 = vadd.xlane.f32.xlu0 %v1374
    %v1378 = vpop.xlane.xlu0 %1377
    %1379 = vadd.xlane.f32.xlu0 %v1375
    %v1380 = vpop.xlane.xlu0 %1379
    %1381 = vadd.xlane.f32.xlu0 %v1376
    %v1382 = vpop.xlane.xlu0 %1381
    %v1383 = vadd.f32 %v1368, %v1378
    %v1384 = vadd.f32 %v1369, %v1380
    %v1385 = vadd.f32 %v1370, %v1382
    %v1386 = vmul.f32 %v1383, %v1352
    %v1387 = vmul.f32 %v1384, %v1352
    %v1388 = vmul.f32 %v1385, %v1352
    %v1389 = vld [vmem:[%s2] sm:$0xff]
    %v1390 = vld [vmem:[%s2 + $0x8] sm:$0xff]
    %v1391 = vld [vmem:[%s2 + $0x10] sm:$0xff]
    %v1392 = vadd.f32 %v1386, 1e-05
    %v1393 = vadd.f32 %v1387, 1e-05
    %v1394 = vadd.f32 %v1388, 1e-05
    %v1395 = vrsqrt.pop %v1392
    %v1396 = vrsqrt.pop %v1393
    %v1397 = vrsqrt.pop %v1394
    %v1398 = vmul.f32 %v1389, %v1395
    %v1399 = vmul.f32 %v1390, %v1396
    %v1400 = vmul.f32 %v1391, %v1397
    %s1401 = scalar_lea.vmem %s2, 24
    %v1402 = vld [vmem:[%s1401] sm:$0xff]
    %v1403 = vld [vmem:[%s1401 + $0x8] sm:$0xff]
    %v1404 = vld [vmem:[%s1401 + $0x10] sm:$0xff]
    %v1405 = vmul.f32 %v1353, %v1398
    %v1406 = vmul.f32 %v1354, %v1399
    %v1407 = vmul.f32 %v1355, %v1400
    %v1408 = vsub.f32 %v1402, %v1405
    %v1409 = vsub.f32 %v1403, %v1406
    %v1410 = vsub.f32 %v1404, %v1407
    %1412 = vset.pattern.permute.xlu0 0
    %1413 = vperm.xlu0 %1412, %v1398
    %v1414 = vpop.permute.xlu0 %1413
    %1417 = vset.pattern.permute.xlu0 0
    %1418 = vperm.xlu0 %1417, %v1399
    %v1419 = vpop.permute.xlu0 %1418
    %1422 = vset.pattern.permute.xlu0 0
    %1423 = vperm.xlu0 %1422, %v1400
    %v1424 = vpop.permute.xlu0 %1423
    %v1426 = vmul.f32 %v1248, %v1414
    %v1427 = vmul.f32 %v1249, %v1419
    %v1428 = vmul.f32 %v1250, %v1424
    %1430 = vset.pattern.permute.xlu0 0
    %1431 = vperm.xlu0 %1430, %v1408
    %v1432 = vpop.permute.xlu0 %1431
    %1435 = vset.pattern.permute.xlu0 0
    %1436 = vperm.xlu0 %1435, %v1409
    %v1437 = vpop.permute.xlu0 %1436
    %1440 = vset.pattern.permute.xlu0 0
    %1441 = vperm.xlu0 %1440, %v1410
    %v1442 = vpop.permute.xlu0 %1441
    %v1444 = vadd.f32 %v1426, %v1432
    %v1445 = vadd.f32 %v1427, %v1437
    %v1446 = vadd.f32 %v1428, %v1442
    %v1447 = vmax.f32 %v1444, 0.0
    %v1448 = vmax.f32 %v1445, 0.0
    %v1449 = vmax.f32 %v1446, 0.0
    %1450 = vst [vmem:[#allocation2] sm:$0xff] %v1447
    %1451 = vst [vmem:[#allocation2 + $0x8] sm:$0xff] %v1448
    %1452 = vst [vmem:[#allocation2 + $0x10] sm:$0xff] %v1449
    %v1453 = vmul.f32 %v1334, %v1414
    %v1454 = vmul.f32 %v1335, %v1419
    %v1455 = vmul.f32 %v1336, %v1424
    %v1456 = vadd.f32 %v1453, %v1432
    %v1457 = vadd.f32 %v1454, %v1437
    %v1458 = vadd.f32 %v1455, %v1442
    %v1459 = vmax.f32 %v1456, 0.0
    %v1460 = vmax.f32 %v1457, 0.0
    %v1461 = vmax.f32 %v1458, 0.0
    %s1462 = scalar_lea.vmem [#allocation2], 24
    %1463 = vst [vmem:[%s1462] sm:$0xff] %v1459
    %1464 = vst [vmem:[%s1462 + $0x8] sm:$0xff] %v1460
    %1465 = vst [vmem:[%s1462 + $0x10] sm:$0xff] %v1461
    // Predicated region
    $region14: #{tpu_custom_call.1} parent=1 // pred_check
      _
    $region15: #{tpu_custom_call.1} parent=1 // pred_check_branch
      %1467 = sbr.rel (0) target = $region17
    $region16: #{tpu_custom_call.1} parent=1 // pred_region
      %s1469 = ssub.s32 768, 768
      %1470 = vsyncadd [#allocation3], %s1469
      %s1471 = sshll.u32 [#allocation2], 4
      %s1472 = int_to_ptr.vmem [resolvable:$true] %s1471
      %1477 = dma.vmem_to_hbm [thread:$0]  %s1472, 768, %s3, [#allocation3], 128, 128, 8
    $region17: #{tpu_custom_call.1} parent=1 // pred_fallthru
      _
    // Predicated region
    $region18: #{tpu_custom_call.1} parent=1 // pred_check
      _
    $region19: #{tpu_custom_call.1} parent=1 // pred_check_branch
      %1479 = sbr.rel (0) target = $region21
    $region20: #{tpu_custom_call.1} parent=1 // pred_region
      %1480 = dma.done [#allocation3], 768
    $region21: #{tpu_custom_call.1} parent=1 // pred_fallthru
      _
    %1481 = vsyncpa [#allocation3], 1

</llo_original>
